<compile_context>
chip_gen: v6e
topology: v6e:2x2x1
jax: 0.10.0
libtpu: 0.0.40
codegen_flags: <defaults>
</compile_context>

<pallas_src>
import jax
import jax.numpy as jnp
import numpy as np
from jax.experimental import pallas as pl
from jax.experimental.pallas import tpu as pltpu

# ---- static configuration (module hyper-params + small example shapes) -----
B = 2            # batch
C_IN = 64        # in_channels (divisible by SCALE)
C_OUT = 64       # out_channels
T = 16           # time steps
SCALE = 8        # Res2 scale (default)
DIL = 2          # dilation
SUB = C_IN // SCALE      # sub-channels per Res2 group
NG = SCALE - 1           # number of conv groups
BNECK = 128      # SE bottleneck (default)
EPS = 1e-5       # BatchNorm eps

TP = T + 2 * DIL                     # per-batch padded time (halo for dilated taps)
L = B * TP                           # packed lane length (valid region)
W = ((L + 127) // 128) * 128         # lane-padded packed width (multiple of 128)

# packed bias layout (offsets are multiples of 8 -> aligned sublane slices)
OFF_CSH = 0                          # (NG*SUB,) conv bias folded into BN shift
OFF_SE1 = OFF_CSH + NG * SUB         # (BNECK,)  SE bottleneck bias
OFF_SE2 = OFF_SE1 + BNECK            # (C_IN,)   SE expansion bias
OFF_BN2 = OFF_SE2 + C_IN             # (C_OUT,)  out-conv bias folded into final BN
NBIAS = OFF_BN2 + C_OUT


def tdnn_kernel(x0_ref, xs_ref, wbig_ref, wch_ref, sew1_ref, sew2_ref,
                outw_ref, bias_ref, ind_ref, pool_ref, mask_ref,
                o_ref, xc_ref):
    mask = mask_ref[...]                                        # (1, W) valid columns

    # ---- x-dependent tap contributions of ALL conv groups: one (56,168)@(168,W)
    # matmul hoisted off the serial chain (BN scale folded into wbig, bias below).
    c_all = jnp.dot(wbig_ref[...], xs_ref[...],
                    preferred_element_type=jnp.float32)         # (NG*SUB, W)
    c_all = c_all + bias_ref[OFF_CSH:OFF_CSH + NG * SUB, :]

    # ---------------- Res2 multi-scale serial chain -------------------------
    xc_ref[0:SUB, :] = x0_ref[...]                              # group 0 passthrough
    y = jnp.maximum(c_all[0:SUB, :], 0.0) * mask                # group 1 (no residual)
    xc_ref[SUB:2 * SUB, :] = y
    for i in range(2, SCALE):
        # 3-tap dilated conv of the previous group's output: lane rolls give the
        # +-DIL shifted views (halo columns of y are zero thanks to `* mask`, and
        # >=2*DIL zero columns separate batches, so rolls never mix batches).
        y_stack = jnp.concatenate(
            [pltpu.roll(y, DIL, axis=1),          # tap 0: reads column j - DIL
             y,                                   # tap 1
             pltpu.roll(y, W - DIL, axis=1)],     # tap 2: reads column j + DIL
            axis=0)                               # (3*SUB, W), sublane-aligned stack
        w_i = wch_ref[(i - 2) * SUB:(i - 1) * SUB, :]           # (SUB, 3*SUB)
        pre = c_all[(i - 1) * SUB:i * SUB, :] + jnp.dot(
            w_i, y_stack, preferred_element_type=jnp.float32)
        y = jnp.maximum(pre, 0.0) * mask
        xc_ref[i * SUB:(i + 1) * SUB, :] = y

    xc = xc_ref[...]                                            # (C_IN, W)

    # ---------------- SE block (batched over B via packed matmuls) ----------
    s = jnp.dot(xc, pool_ref[...], preferred_element_type=jnp.float32)       # (C_IN, B)
    h = jnp.dot(sew1_ref[...], s, preferred_element_type=jnp.float32)
    h = jnp.maximum(h + bias_ref[OFF_SE1:OFF_SE1 + BNECK, :], 0.0)           # (BNECK, B)
    g = jnp.dot(sew2_ref[...], h, preferred_element_type=jnp.float32)
    g = jax.nn.sigmoid(g + bias_ref[OFF_SE2:OFF_SE2 + C_IN, :])              # (C_IN, B)
    gate = jnp.dot(g, ind_ref[...], preferred_element_type=jnp.float32)      # (C_IN, W)
    xs = xc * gate                                                           # re-weighting

    # ---------------- 1x1 out conv (BN scale folded) + shift + ReLU ---------
    yo = jnp.dot(outw_ref[...], xs, preferred_element_type=jnp.float32)      # (C_OUT, W)
    o_ref[...] = jnp.maximum(yo + bias_ref[OFF_BN2:OFF_BN2 + C_OUT, :], 0.0)


def tdnn_layer(x, params):
    (convw, convb, bns, bnb, sew1, seb1, sew2, seb2,
     outw, outb, bn2s, bn2b) = params

    # ---- parameter folding (glue code; nothing per-call left in kernel) -----
    # fuse the 3 conv taps:  wf[i, o, k*SUB + c] = convw[i, k, o, c]; fold BN scale
    wf = jnp.transpose(convw, (0, 2, 1, 3)).reshape(NG, SUB, 3 * SUB)
    wf = (wf * bns).astype(jnp.float32)                         # row-scale (gamma/std)
    cshift = (convb * bns + bnb).reshape(NG * SUB, 1)           # conv bias -> BN shift
    outw_s = (outw * bn2s).astype(jnp.float32)                  # fold final BN scale
    bn2bf = outb * bn2s + bn2b                                  # out bias -> BN shift

    # block-diagonal weight for the hoisted "x half" of all 7 group convs
    wbig = jnp.zeros((NG * SUB, NG * 3 * SUB), jnp.float32)
    for g in range(NG):
        wbig = wbig.at[g * SUB:(g + 1) * SUB,
                       g * 3 * SUB:(g + 1) * 3 * SUB].set(wf[g])
    # weights for the serial y-chain convs (groups 2..SCALE-1) as one 2D slab
    wch = wf[1:].reshape((SCALE - 2) * SUB, 3 * SUB)

    # single packed per-channel shift vector (one DMA instead of four tiny ones)
    bias_pack = jnp.concatenate(
        [cshift, seb1.reshape(BNECK, 1), seb2.reshape(C_IN, 1),
         bn2bf.reshape(C_OUT, 1)], axis=0).astype(jnp.float32)   # (NBIAS, 1)

    # ---- pack (B, C, T) -> (C, W): per-batch zero halos + lane padding to 128 ----
    x_pp = jnp.pad(jnp.transpose(x, (1, 0, 2)), ((0, 0), (0, 0), (DIL, DIL)))
    x_pp = x_pp.reshape(C_IN, L)
    x_pp = jnp.pad(x_pp, ((0, 0), (0, W - L))).astype(jnp.float32)   # (C_IN, W)
    x0 = x_pp[0:SUB, :]                                              # group-0 rows

    # stacked +-DIL shifted views of groups 1..7 (layout plumbing for the wbig matmul)
    xg = x_pp[SUB:, :]                                               # (NG*SUB, W)
    v0 = jnp.pad(xg, ((0, 0), (DIL, 0)))[:, :W]                      # column j - DIL
    v2 = jnp.pad(xg, ((0, 0), (0, DIL)))[:, DIL:]                    # column j + DIL
    views = jnp.stack([v0, xg, v2], axis=0)                          # (3, NG*SUB, W)
    x_stacked = views.reshape(3, NG, SUB, W).transpose(1, 0, 2, 3).reshape(
        NG * 3 * SUB, W)                                             # (168, W)

    # constant segment matrices: valid-position indicator, mean-pool, lane mask
    ind_np = np.zeros((B, W), np.float32)
    for b in range(B):
        ind_np[b, b * TP + DIL: b * TP + DIL + T] = 1.0
    ind = jnp.asarray(ind_np)                                        # (B, W)
    pool = jnp.asarray(ind_np.T / np.float32(T))                     # (W, B) mean-pool
    mask = jnp.asarray(ind_np.sum(axis=0, keepdims=True))            # (1, W)

    out_pp = pl.pallas_call(
        tdnn_kernel,
        out_shape=jax.ShapeDtypeStruct((C_OUT, W), jnp.float32),
        scratch_shapes=[pltpu.VMEM((C_IN, W), jnp.float32)],
    )(x0, x_stacked, wbig, wch, sew1.astype(jnp.float32),
      sew2.astype(jnp.float32), outw_s, bias_pack, ind, pool, mask)

    out = out_pp[:, :L].reshape(C_OUT, B, TP)[:, :, DIL:DIL + T]
    return jnp.transpose(out, (1, 0, 2))                             # (B, C_OUT, T)


# ---------------- pure-JAX reference (for correctness check) ----------------
def reference(x, params):
    (convw, convb, bns, bnb, sew1, seb1, sew2, seb2,
     outw, outb, bn2s, bn2b) = params
    hi = jax.lax.Precision.HIGHEST

    def conv_group(xg, w, b):
        xp = jnp.pad(xg, ((0, 0), (0, 0), (DIL, DIL)))
        out = 0.0
        for k in range(3):
            out = out + jnp.einsum('oc,bct->bot', w[k],
                                   xp[:, :, k * DIL:k * DIL + T], precision=hi)
        return out + b[None]

    groups = [x[:, i * SUB:(i + 1) * SUB, :] for i in range(SCALE)]
    outs = [groups[0]]
    for i in range(1, SCALE):
        inp = groups[i] if i == 1 else groups[i] + outs[i - 1]
        y = conv_group(inp, convw[i - 1], convb[i - 1])
        y = y * bns[i - 1][None] + bnb[i - 1][None]
        outs.append(jnp.maximum(y, 0.0))
    xc = jnp.concatenate(outs, axis=1)
    s = jnp.mean(xc, axis=2, keepdims=True)
    h = jnp.maximum(jnp.einsum('nc,bcx->bnx', sew1, s, precision=hi) + seb1[None], 0.0)
    g = jax.nn.sigmoid(jnp.einsum('cn,bnx->bcx', sew2, h, precision=hi) + seb2[None])
    xs = xc * g
    y = jnp.einsum('oc,bct->bot', outw, xs, precision=hi) + outb[None]
    y = y * bn2s[None] + bn2b[None]
    return jnp.maximum(y, 0.0)


def make_params(key):
    ks = jax.random.split(key, 17)
    convw = 0.2 * jax.random.normal(ks[0], (NG, 3, SUB, SUB))
    convb = 0.1 * jax.random.normal(ks[1], (NG, SUB, 1))
    gamma = 1.0 + 0.1 * jax.random.normal(ks[2], (NG, SUB, 1))
    beta = 0.1 * jax.random.normal(ks[3], (NG, SUB, 1))
    rmean = 0.1 * jax.random.normal(ks[4], (NG, SUB, 1))
    rvar = 1.0 + 0.1 * jnp.abs(jax.random.normal(ks[5], (NG, SUB, 1)))
    bns = gamma / jnp.sqrt(rvar + EPS)
    bnb = beta - rmean * bns
    sew1 = 0.1 * jax.random.normal(ks[6], (BNECK, C_IN))
    seb1 = 0.1 * jax.random.normal(ks[7], (BNECK, 1))
    sew2 = 0.1 * jax.random.normal(ks[8], (C_IN, BNECK))
    seb2 = 0.1 * jax.random.normal(ks[9], (C_IN, 1))
    outw = 0.1 * jax.random.normal(ks[10], (C_OUT, C_IN))
    outb = 0.1 * jax.random.normal(ks[11], (C_OUT, 1))
    g2 = 1.0 + 0.1 * jax.random.normal(ks[12], (C_OUT, 1))
    b2 = 0.1 * jax.random.normal(ks[13], (C_OUT, 1))
    m2 = 0.1 * jax.random.normal(ks[14], (C_OUT, 1))
    v2 = 1.0 + 0.1 * jnp.abs(jax.random.normal(ks[15], (C_OUT, 1)))
    bn2s = g2 / jnp.sqrt(v2 + EPS)
    bn2b = b2 - m2 * bn2s
    x = jax.random.normal(ks[16], (B, C_IN, T))
    return x, (convw, convb, bns, bnb, sew1, seb1, sew2, seb2,
               outw, outb, bn2s, bn2b)


if __name__ == "__main__":
    x, params = make_params(jax.random.PRNGKey(0))
    out = jax.block_until_ready(tdnn_layer(x, params))
    ref = jax.block_until_ready(reference(x, params))
    assert out.shape == (B, C_OUT, T) and out.dtype == jnp.float32
    np.testing.assert_allclose(np.asarray(out), np.asarray(ref), rtol=5e-3, atol=5e-3)
    print("KERNEL_OK")
</pallas_src>

<mosaic_0001>
module attributes {stable_mosaic.version = 11 : i64} {
  func.func @tdnn_kernel(%arg0: memref<8x128xf32, #tpu.memory_space<vmem>>, %arg1: memref<168x128xf32, #tpu.memory_space<vmem>>, %arg2: memref<56x168xf32, #tpu.memory_space<vmem>>, %arg3: memref<48x24xf32, #tpu.memory_space<vmem>>, %arg4: memref<128x64xf32, #tpu.memory_space<vmem>>, %arg5: memref<64x128xf32, #tpu.memory_space<vmem>>, %arg6: memref<64x64xf32, #tpu.memory_space<vmem>>, %arg7: memref<312x1xf32, #tpu.memory_space<vmem>>, %arg8: memref<2x128xf32, #tpu.memory_space<vmem>>, %arg9: memref<128x2xf32, #tpu.memory_space<vmem>>, %arg10: memref<1x128xf32, #tpu.memory_space<vmem>>, %arg11: memref<64x128xf32, #tpu.memory_space<vmem>>, %arg12: memref<64x128xf32, #tpu.memory_space<vmem>>) attributes {dimension_semantics = [], scalar_prefetch = 0 : i64, scratch_operands = 1 : i64, tpu.core_type = #tpu.core_type<tc>} {
    %c0 = arith.constant 0 : index
    %c0_0 = arith.constant 0 : index
    %0 = vector.load %arg10[%c0, %c0_0] : memref<1x128xf32, #tpu.memory_space<vmem>>, vector<1x128xf32>
    %c0_1 = arith.constant 0 : index
    %c0_2 = arith.constant 0 : index
    %1 = vector.load %arg2[%c0_1, %c0_2] : memref<56x168xf32, #tpu.memory_space<vmem>>, vector<56x168xf32>
    %c0_3 = arith.constant 0 : index
    %c0_4 = arith.constant 0 : index
    %2 = vector.load %arg1[%c0_3, %c0_4] : memref<168x128xf32, #tpu.memory_space<vmem>>, vector<168x128xf32>
    %cst = arith.constant dense<0.000000e+00> : vector<56x128xf32>
    %3 = tpu.matmul %1, %2, %cst {dimension_numbers = #tpu.dot_dimension_numbers<[1], [0], [0], [1], [0, 0, 1, 1], [], []>} : vector<56x168xf32>, vector<168x128xf32>, vector<56x128xf32> -> vector<56x128xf32>
    %c0_5 = arith.constant 0 : index
    %c0_6 = arith.constant 0 : index
    %4 = vector.load %arg7[%c0_5, %c0_6] : memref<312x1xf32, #tpu.memory_space<vmem>>, vector<56x1xf32>
    %5 = vector.broadcast %4 : vector<56x1xf32> to vector<56x128xf32>
    %6 = arith.addf %3, %5 : vector<56x128xf32>
    %c0_7 = arith.constant 0 : index
    %c0_8 = arith.constant 0 : index
    %7 = vector.load %arg0[%c0_7, %c0_8] : memref<8x128xf32, #tpu.memory_space<vmem>>, vector<8x128xf32>
    %c0_9 = arith.constant 0 : index
    %c0_10 = arith.constant 0 : index
    %8 = vector.load %arg12[%c0_9, %c0_10] : memref<64x128xf32, #tpu.memory_space<vmem>>, vector<8x128xf32>
    tpu.vector_store %arg12[%c0_9, %c0_10], %7 {strides = array<i32>} : memref<64x128xf32, #tpu.memory_space<vmem>>, vector<8x128xf32>,
    %9 = vector.extract_strided_slice %6 {offsets = [0, 0], sizes = [8, 128], strides = [1, 1]} : vector<56x128xf32> to vector<8x128xf32>
    %cst_11 = arith.constant 0.000000e+00 : f32
    %10 = vector.broadcast %cst_11 : f32 to vector<8x128xf32>
    %11 = arith.maximumf %9, %10 : vector<8x128xf32>
    %12 = vector.broadcast %0 : vector<1x128xf32> to vector<8x128xf32>
    %13 = arith.mulf %11, %12 : vector<8x128xf32>
    %c8 = arith.constant 8 : index
    %c0_12 = arith.constant 0 : index
    %14 = vector.load %arg12[%c8, %c0_12] : memref<64x128xf32, #tpu.memory_space<vmem>>, vector<8x128xf32>
    tpu.vector_store %arg12[%c8, %c0_12], %13 {strides = array<i32>} : memref<64x128xf32, #tpu.memory_space<vmem>>, vector<8x128xf32>,
    %c2_i32 = arith.constant 2 : i32
    %15 = tpu.dynamic_rotate %13 by %c2_i32 dim 1 : vector<8x128xf32>, i32 -> vector<8x128xf32>
    %c126_i32 = arith.constant 126 : i32
    %16 = tpu.dynamic_rotate %13 by %c126_i32 dim 1 : vector<8x128xf32>, i32 -> vector<8x128xf32>
    %17 = tpu.concatenate %15, %13, %16 in 0 : vector<8x128xf32>, vector<8x128xf32>, vector<8x128xf32> -> vector<24x128xf32>
    %c0_13 = arith.constant 0 : index
    %c0_14 = arith.constant 0 : index
    %18 = vector.load %arg3[%c0_13, %c0_14] : memref<48x24xf32, #tpu.memory_space<vmem>>, vector<8x24xf32>
    %19 = vector.extract_strided_slice %6 {offsets = [8, 0], sizes = [8, 128], strides = [1, 1]} : vector<56x128xf32> to vector<8x128xf32>
    %cst_15 = arith.constant dense<0.000000e+00> : vector<8x128xf32>
    %20 = tpu.matmul %18, %17, %cst_15 {dimension_numbers = #tpu.dot_dimension_numbers<[1], [0], [0], [1], [0, 0, 1, 1], [], []>} : vector<8x24xf32>, vector<24x128xf32>, vector<8x128xf32> -> vector<8x128xf32>
    %21 = arith.addf %19, %20 : vector<8x128xf32>
    %cst_16 = arith.constant 0.000000e+00 : f32
    %22 = vector.broadcast %cst_16 : f32 to vector<8x128xf32>
    %23 = arith.maximumf %21, %22 : vector<8x128xf32>
    %24 = vector.broadcast %0 : vector<1x128xf32> to vector<8x128xf32>
    %25 = arith.mulf %23, %24 : vector<8x128xf32>
    %c16 = arith.constant 16 : index
    %c0_17 = arith.constant 0 : index
    %26 = vector.load %arg12[%c16, %c0_17] : memref<64x128xf32, #tpu.memory_space<vmem>>, vector<8x128xf32>
    tpu.vector_store %arg12[%c16, %c0_17], %25 {strides = array<i32>} : memref<64x128xf32, #tpu.memory_space<vmem>>, vector<8x128xf32>,
    %c2_i32_18 = arith.constant 2 : i32
    %27 = tpu.dynamic_rotate %25 by %c2_i32_18 dim 1 : vector<8x128xf32>, i32 -> vector<8x128xf32>
    %c126_i32_19 = arith.constant 126 : i32
    %28 = tpu.dynamic_rotate %25 by %c126_i32_19 dim 1 : vector<8x128xf32>, i32 -> vector<8x128xf32>
    %29 = tpu.concatenate %27, %25, %28 in 0 : vector<8x128xf32>, vector<8x128xf32>, vector<8x128xf32> -> vector<24x128xf32>
    %c8_20 = arith.constant 8 : index
    %c0_21 = arith.constant 0 : index
    %30 = vector.load %arg3[%c8_20, %c0_21] : memref<48x24xf32, #tpu.memory_space<vmem>>, vector<8x24xf32>
    %31 = vector.extract_strided_slice %6 {offsets = [16, 0], sizes = [8, 128], strides = [1, 1]} : vector<56x128xf32> to vector<8x128xf32>
    %cst_22 = arith.constant dense<0.000000e+00> : vector<8x128xf32>
    %32 = tpu.matmul %30, %29, %cst_22 {dimension_numbers = #tpu.dot_dimension_numbers<[1], [0], [0], [1], [0, 0, 1, 1], [], []>} : vector<8x24xf32>, vector<24x128xf32>, vector<8x128xf32> -> vector<8x128xf32>
    %33 = arith.addf %31, %32 : vector<8x128xf32>
    %cst_23 = arith.constant 0.000000e+00 : f32
    %34 = vector.broadcast %cst_23 : f32 to vector<8x128xf32>
    %35 = arith.maximumf %33, %34 : vector<8x128xf32>
    %36 = vector.broadcast %0 : vector<1x128xf32> to vector<8x128xf32>
    %37 = arith.mulf %35, %36 : vector<8x128xf32>
    %c24 = arith.constant 24 : index
    %c0_24 = arith.constant 0 : index
    %38 = vector.load %arg12[%c24, %c0_24] : memref<64x128xf32, #tpu.memory_space<vmem>>, vector<8x128xf32>
    tpu.vector_store %arg12[%c24, %c0_24], %37 {strides = array<i32>} : memref<64x128xf32, #tpu.memory_space<vmem>>, vector<8x128xf32>,
    %c2_i32_25 = arith.constant 2 : i32
    %39 = tpu.dynamic_rotate %37 by %c2_i32_25 dim 1 : vector<8x128xf32>, i32 -> vector<8x128xf32>
    %c126_i32_26 = arith.constant 126 : i32
    %40 = tpu.dynamic_rotate %37 by %c126_i32_26 dim 1 : vector<8x128xf32>, i32 -> vector<8x128xf32>
    %41 = tpu.concatenate %39, %37, %40 in 0 : vector<8x128xf32>, vector<8x128xf32>, vector<8x128xf32> -> vector<24x128xf32>
    %c16_27 = arith.constant 16 : index
    %c0_28 = arith.constant 0 : index
    %42 = vector.load %arg3[%c16_27, %c0_28] : memref<48x24xf32, #tpu.memory_space<vmem>>, vector<8x24xf32>
    %43 = vector.extract_strided_slice %6 {offsets = [24, 0], sizes = [8, 128], strides = [1, 1]} : vector<56x128xf32> to vector<8x128xf32>
    %cst_29 = arith.constant dense<0.000000e+00> : vector<8x128xf32>
    %44 = tpu.matmul %42, %41, %cst_29 {dimension_numbers = #tpu.dot_dimension_numbers<[1], [0], [0], [1], [0, 0, 1, 1], [], []>} : vector<8x24xf32>, vector<24x128xf32>, vector<8x128xf32> -> vector<8x128xf32>
    %45 = arith.addf %43, %44 : vector<8x128xf32>
    %cst_30 = arith.constant 0.000000e+00 : f32
    %46 = vector.broadcast %cst_30 : f32 to vector<8x128xf32>
    %47 = arith.maximumf %45, %46 : vector<8x128xf32>
    %48 = vector.broadcast %0 : vector<1x128xf32> to vector<8x128xf32>
    %49 = arith.mulf %47, %48 : vector<8x128xf32>
    %c32 = arith.constant 32 : index
    %c0_31 = arith.constant 0 : index
    %50 = vector.load %arg12[%c32, %c0_31] : memref<64x128xf32, #tpu.memory_space<vmem>>, vector<8x128xf32>
    tpu.vector_store %arg12[%c32, %c0_31], %49 {strides = array<i32>} : memref<64x128xf32, #tpu.memory_space<vmem>>, vector<8x128xf32>,
    %c2_i32_32 = arith.constant 2 : i32
    %51 = tpu.dynamic_rotate %49 by %c2_i32_32 dim 1 : vector<8x128xf32>, i32 -> vector<8x128xf32>
    %c126_i32_33 = arith.constant 126 : i32
    %52 = tpu.dynamic_rotate %49 by %c126_i32_33 dim 1 : vector<8x128xf32>, i32 -> vector<8x128xf32>
    %53 = tpu.concatenate %51, %49, %52 in 0 : vector<8x128xf32>, vector<8x128xf32>, vector<8x128xf32> -> vector<24x128xf32>
    %c24_34 = arith.constant 24 : index
    %c0_35 = arith.constant 0 : index
    %54 = vector.load %arg3[%c24_34, %c0_35] : memref<48x24xf32, #tpu.memory_space<vmem>>, vector<8x24xf32>
    %55 = vector.extract_strided_slice %6 {offsets = [32, 0], sizes = [8, 128], strides = [1, 1]} : vector<56x128xf32> to vector<8x128xf32>
    %cst_36 = arith.constant dense<0.000000e+00> : vector<8x128xf32>
    %56 = tpu.matmul %54, %53, %cst_36 {dimension_numbers = #tpu.dot_dimension_numbers<[1], [0], [0], [1], [0, 0, 1, 1], [], []>} : vector<8x24xf32>, vector<24x128xf32>, vector<8x128xf32> -> vector<8x128xf32>
    %57 = arith.addf %55, %56 : vector<8x128xf32>
    %cst_37 = arith.constant 0.000000e+00 : f32
    %58 = vector.broadcast %cst_37 : f32 to vector<8x128xf32>
    %59 = arith.maximumf %57, %58 : vector<8x128xf32>
    %60 = vector.broadcast %0 : vector<1x128xf32> to vector<8x128xf32>
    %61 = arith.mulf %59, %60 : vector<8x128xf32>
    %c40 = arith.constant 40 : index
    %c0_38 = arith.constant 0 : index
    %62 = vector.load %arg12[%c40, %c0_38] : memref<64x128xf32, #tpu.memory_space<vmem>>, vector<8x128xf32>
    tpu.vector_store %arg12[%c40, %c0_38], %61 {strides = array<i32>} : memref<64x128xf32, #tpu.memory_space<vmem>>, vector<8x128xf32>,
    %c2_i32_39 = arith.constant 2 : i32
    %63 = tpu.dynamic_rotate %61 by %c2_i32_39 dim 1 : vector<8x128xf32>, i32 -> vector<8x128xf32>
    %c126_i32_40 = arith.constant 126 : i32
    %64 = tpu.dynamic_rotate %61 by %c126_i32_40 dim 1 : vector<8x128xf32>, i32 -> vector<8x128xf32>
    %65 = tpu.concatenate %63, %61, %64 in 0 : vector<8x128xf32>, vector<8x128xf32>, vector<8x128xf32> -> vector<24x128xf32>
    %c32_41 = arith.constant 32 : index
    %c0_42 = arith.constant 0 : index
    %66 = vector.load %arg3[%c32_41, %c0_42] : memref<48x24xf32, #tpu.memory_space<vmem>>, vector<8x24xf32>
    %67 = vector.extract_strided_slice %6 {offsets = [40, 0], sizes = [8, 128], strides = [1, 1]} : vector<56x128xf32> to vector<8x128xf32>
    %cst_43 = arith.constant dense<0.000000e+00> : vector<8x128xf32>
    %68 = tpu.matmul %66, %65, %cst_43 {dimension_numbers = #tpu.dot_dimension_numbers<[1], [0], [0], [1], [0, 0, 1, 1], [], []>} : vector<8x24xf32>, vector<24x128xf32>, vector<8x128xf32> -> vector<8x128xf32>
    %69 = arith.addf %67, %68 : vector<8x128xf32>
    %cst_44 = arith.constant 0.000000e+00 : f32
    %70 = vector.broadcast %cst_44 : f32 to vector<8x128xf32>
    %71 = arith.maximumf %69, %70 : vector<8x128xf32>
    %72 = vector.broadcast %0 : vector<1x128xf32> to vector<8x128xf32>
    %73 = arith.mulf %71, %72 : vector<8x128xf32>
    %c48 = arith.constant 48 : index
    %c0_45 = arith.constant 0 : index
    %74 = vector.load %arg12[%c48, %c0_45] : memref<64x128xf32, #tpu.memory_space<vmem>>, vector<8x128xf32>
    tpu.vector_store %arg12[%c48, %c0_45], %73 {strides = array<i32>} : memref<64x128xf32, #tpu.memory_space<vmem>>, vector<8x128xf32>,
    %c2_i32_46 = arith.constant 2 : i32
    %75 = tpu.dynamic_rotate %73 by %c2_i32_46 dim 1 : vector<8x128xf32>, i32 -> vector<8x128xf32>
    %c126_i32_47 = arith.constant 126 : i32
    %76 = tpu.dynamic_rotate %73 by %c126_i32_47 dim 1 : vector<8x128xf32>, i32 -> vector<8x128xf32>
    %77 = tpu.concatenate %75, %73, %76 in 0 : vector<8x128xf32>, vector<8x128xf32>, vector<8x128xf32> -> vector<24x128xf32>
    %c40_48 = arith.constant 40 : index
    %c0_49 = arith.constant 0 : index
    %78 = vector.load %arg3[%c40_48, %c0_49] : memref<48x24xf32, #tpu.memory_space<vmem>>, vector<8x24xf32>
    %79 = vector.extract_strided_slice %6 {offsets = [48, 0], sizes = [8, 128], strides = [1, 1]} : vector<56x128xf32> to vector<8x128xf32>
    %cst_50 = arith.constant dense<0.000000e+00> : vector<8x128xf32>
    %80 = tpu.matmul %78, %77, %cst_50 {dimension_numbers = #tpu.dot_dimension_numbers<[1], [0], [0], [1], [0, 0, 1, 1], [], []>} : vector<8x24xf32>, vector<24x128xf32>, vector<8x128xf32> -> vector<8x128xf32>
    %81 = arith.addf %79, %80 : vector<8x128xf32>
    %cst_51 = arith.constant 0.000000e+00 : f32
    %82 = vector.broadcast %cst_51 : f32 to vector<8x128xf32>
    %83 = arith.maximumf %81, %82 : vector<8x128xf32>
    %84 = vector.broadcast %0 : vector<1x128xf32> to vector<8x128xf32>
    %85 = arith.mulf %83, %84 : vector<8x128xf32>
    %c56 = arith.constant 56 : index
    %c0_52 = arith.constant 0 : index
    %86 = vector.load %arg12[%c56, %c0_52] : memref<64x128xf32, #tpu.memory_space<vmem>>, vector<8x128xf32>
    tpu.vector_store %arg12[%c56, %c0_52], %85 {strides = array<i32>} : memref<64x128xf32, #tpu.memory_space<vmem>>, vector<8x128xf32>,
    %c0_53 = arith.constant 0 : index
    %c0_54 = arith.constant 0 : index
    %87 = vector.load %arg12[%c0_53, %c0_54] : memref<64x128xf32, #tpu.memory_space<vmem>>, vector<64x128xf32>
    %c0_55 = arith.constant 0 : index
    %c0_56 = arith.constant 0 : index
    %88 = vector.load %arg9[%c0_55, %c0_56] : memref<128x2xf32, #tpu.memory_space<vmem>>, vector<128x2xf32>
    %cst_57 = arith.constant dense<0.000000e+00> : vector<64x2xf32>
    %89 = tpu.matmul %87, %88, %cst_57 {dimension_numbers = #tpu.dot_dimension_numbers<[1], [0], [0], [1], [0, 0, 1, 1], [], []>} : vector<64x128xf32>, vector<128x2xf32>, vector<64x2xf32> -> vector<64x2xf32>
    %c0_58 = arith.constant 0 : index
    %c0_59 = arith.constant 0 : index
    %90 = vector.load %arg4[%c0_58, %c0_59] : memref<128x64xf32, #tpu.memory_space<vmem>>, vector<128x64xf32>
    %cst_60 = arith.constant dense<0.000000e+00> : vector<128x2xf32>
    %91 = tpu.matmul %90, %89, %cst_60 {dimension_numbers = #tpu.dot_dimension_numbers<[1], [0], [0], [1], [0, 0, 1, 1], [], []>} : vector<128x64xf32>, vector<64x2xf32>, vector<128x2xf32> -> vector<128x2xf32>
    %c56_61 = arith.constant 56 : index
    %c0_62 = arith.constant 0 : index
    %92 = vector.load %arg7[%c56_61, %c0_62] : memref<312x1xf32, #tpu.memory_space<vmem>>, vector<128x1xf32>
    %93 = vector.broadcast %92 : vector<128x1xf32> to vector<128x2xf32>
    %94 = arith.addf %91, %93 : vector<128x2xf32>
    %cst_63 = arith.constant 0.000000e+00 : f32
    %95 = vector.broadcast %cst_63 : f32 to vector<128x2xf32>
    %96 = arith.maximumf %94, %95 : vector<128x2xf32>
    %c0_64 = arith.constant 0 : index
    %c0_65 = arith.constant 0 : index
    %97 = vector.load %arg5[%c0_64, %c0_65] : memref<64x128xf32, #tpu.memory_space<vmem>>, vector<64x128xf32>
    %cst_66 = arith.constant dense<0.000000e+00> : vector<64x2xf32>
    %98 = tpu.matmul %97, %96, %cst_66 {dimension_numbers = #tpu.dot_dimension_numbers<[1], [0], [0], [1], [0, 0, 1, 1], [], []>} : vector<64x128xf32>, vector<128x2xf32>, vector<64x2xf32> -> vector<64x2xf32>
    %c184 = arith.constant 184 : index
    %c0_67 = arith.constant 0 : index
    %99 = vector.load %arg7[%c184, %c0_67] : memref<312x1xf32, #tpu.memory_space<vmem>>, vector<64x1xf32>
    %100 = vector.broadcast %99 : vector<64x1xf32> to vector<64x2xf32>
    %101 = arith.addf %98, %100 : vector<64x2xf32>
    %102 = arith.negf %101 : vector<64x2xf32>
    %103 = math.exp %102 : vector<64x2xf32>
    %cst_68 = arith.constant 1.000000e+00 : f32
    %104 = vector.broadcast %cst_68 : f32 to vector<64x2xf32>
    %105 = arith.addf %104, %103 : vector<64x2xf32>
    %106 = arith.divf %104, %105 : vector<64x2xf32>
    %c0_69 = arith.constant 0 : index
    %c0_70 = arith.constant 0 : index
    %107 = vector.load %arg8[%c0_69, %c0_70] : memref<2x128xf32, #tpu.memory_space<vmem>>, vector<2x128xf32>
    %cst_71 = arith.constant dense<0.000000e+00> : vector<64x128xf32>
    %108 = tpu.matmul %106, %107, %cst_71 {dimension_numbers = #tpu.dot_dimension_numbers<[1], [0], [0], [1], [0, 0, 1, 1], [], []>} : vector<64x2xf32>, vector<2x128xf32>, vector<64x128xf32> -> vector<64x128xf32>
    %109 = arith.mulf %87, %108 : vector<64x128xf32>
    %c0_72 = arith.constant 0 : index
    %c0_73 = arith.constant 0 : index
    %110 = vector.load %arg6[%c0_72, %c0_73] : memref<64x64xf32, #tpu.memory_space<vmem>>, vector<64x64xf32>
    %cst_74 = arith.constant dense<0.000000e+00> : vector<64x128xf32>
    %111 = tpu.matmul %110, %109, %cst_74 {dimension_numbers = #tpu.dot_dimension_numbers<[1], [0], [0], [1], [0, 0, 1, 1], [], []>} : vector<64x64xf32>, vector<64x128xf32>, vector<64x128xf32> -> vector<64x128xf32>
    %c248 = arith.constant 248 : index
    %c0_75 = arith.constant 0 : index
    %112 = vector.load %arg7[%c248, %c0_75] : memref<312x1xf32, #tpu.memory_space<vmem>>, vector<64x1xf32>
    %113 = vector.broadcast %112 : vector<64x1xf32> to vector<64x128xf32>
    %114 = arith.addf %111, %113 : vector<64x128xf32>
    %cst_76 = arith.constant 0.000000e+00 : f32
    %115 = vector.broadcast %cst_76 : f32 to vector<64x128xf32>
    %116 = arith.maximumf %114, %115 : vector<64x128xf32>
    %c0_77 = arith.constant 0 : index
    %c0_78 = arith.constant 0 : index
    %117 = vector.load %arg11[%c0_77, %c0_78] : memref<64x128xf32, #tpu.memory_space<vmem>>, vector<64x128xf32>
    tpu.vector_store %arg11[%c0_77, %c0_78], %116 {strides = array<i32>} : memref<64x128xf32, #tpu.memory_space<vmem>>, vector<64x128xf32>,
    return
  }
}

</mosaic_0001>

<llo_original>
// kernel: tpu_custom_call.1
$region0: #{tpu_custom_call.1}
  #allocation0 [shape = 'u32[]', space=smem, size = 0x4, offset = 0x4, fixed_abs, tag = 'smem constant byte address 0x4 - core index']
  #allocation1 [shape = 'u32[144,128]{1,0:T(1,128)}', space=vmem, size = 0x12000, scoped, tag = 'internal scratch']
  #allocation2 [shape = 'f32[64,128]{1,0:T(8,128)}', space=vmem, size = 0x8000, scoped, tag = 'scratch operand']
  %s0 = inlined_call_operand.vmem [shape: f32[8,128], index: 0, kind: input, shape index: {}]
  %s1 = inlined_call_operand.vmem [shape: f32[168,128], index: 1, kind: input, shape index: {}]
  %s2 = inlined_call_operand.vmem [shape: f32[56,168], index: 2, kind: input, shape index: {}]
  %s3 = inlined_call_operand.vmem [shape: f32[48,24], index: 3, kind: input, shape index: {}]
  %s4 = inlined_call_operand.vmem [shape: f32[128,64], index: 4, kind: input, shape index: {}]
  %s5 = inlined_call_operand.vmem [shape: f32[64,128], index: 5, kind: input, shape index: {}]
  %s6 = inlined_call_operand.vmem [shape: f32[64,64], index: 6, kind: input, shape index: {}]
  %s7 = inlined_call_operand.vmem [shape: f32[312,1], index: 7, kind: input, shape index: {}]
  %s8 = inlined_call_operand.vmem [shape: f32[2,128], index: 8, kind: input, shape index: {}]
  %s9 = inlined_call_operand.vmem [shape: f32[128,2], index: 9, kind: input, shape index: {}]
  %s10 = inlined_call_operand.vmem [shape: f32[1,128], index: 10, kind: input, shape index: {}]
  %s11 = inlined_call_operand.hbm [shape: f32[64,128], index: 11, kind: output, shape index: {}]
  %s12 = sld [smem:[#allocation0]]
  $region54: #{tpu_custom_call.1} parent=0
    _
  %s14 = ssub.s32 1, %s12
  %s15 = scalar_select 0, %s14, %s12
  $region1: #{tpu_custom_call.1} parent=0
    #allocation3 [shape = 'u8[32768]{0}', space=vmem, size = 0x8000, scoped, tag = 'output window, operand 0, single buffered']
    #allocation4 [shape = 's32[1]{0}', space=sflag, size = 0x4, scoped, tag = 'scoped memory for tpu_custom_call.1']
    %16 = vsyncpa [#allocation4], 0
    // Predicated region
    $region2: #{tpu_custom_call.1} parent=1 // pred_check
      _
    $region3: #{tpu_custom_call.1} parent=1 // pred_check_branch
      %18 = sbr.rel (0) target = $region5
    $region4: #{tpu_custom_call.1} parent=1 // pred_region
      _
    $region5: #{tpu_custom_call.1} parent=1 // pred_fallthru
      _
    // Predicated region
    $region6: #{tpu_custom_call.1} parent=1 // pred_check
      _
    $region7: #{tpu_custom_call.1} parent=1 // pred_check_branch
      %20 = sbr.rel (0) target = $region9
    $region8: #{tpu_custom_call.1} parent=1 // pred_region
      _
    $region9: #{tpu_custom_call.1} parent=1 // pred_fallthru
      _
    // Predicated region
    $region10: #{tpu_custom_call.1} parent=1 // pred_check
      _
    $region11: #{tpu_custom_call.1} parent=1 // pred_check_branch
      %22 = sbr.rel (0) target = $region13
    $region12: #{tpu_custom_call.1} parent=1 // pred_region
      _
    $region13: #{tpu_custom_call.1} parent=1 // pred_fallthru
      _
    // Predicated region
    $region14: #{tpu_custom_call.1} parent=1 // pred_check
      _
    $region15: #{tpu_custom_call.1} parent=1 // pred_check_branch
      %24 = sbr.rel (0) target = $region17
    $region16: #{tpu_custom_call.1} parent=1 // pred_region
      _
    $region17: #{tpu_custom_call.1} parent=1 // pred_fallthru
      _
    // Predicated region
    $region18: #{tpu_custom_call.1} parent=1 // pred_check
      _
    $region19: #{tpu_custom_call.1} parent=1 // pred_check_branch
      %26 = sbr.rel (0) target = $region21
    $region20: #{tpu_custom_call.1} parent=1 // pred_region
      _
    $region21: #{tpu_custom_call.1} parent=1 // pred_fallthru
      _
    // Predicated region
    $region22: #{tpu_custom_call.1} parent=1 // pred_check
      _
    $region23: #{tpu_custom_call.1} parent=1 // pred_check_branch
      %28 = sbr.rel (0) target = $region25
    $region24: #{tpu_custom_call.1} parent=1 // pred_region
      _
    $region25: #{tpu_custom_call.1} parent=1 // pred_fallthru
      _
    // Predicated region
    $region26: #{tpu_custom_call.1} parent=1 // pred_check
      _
    $region27: #{tpu_custom_call.1} parent=1 // pred_check_branch
      %30 = sbr.rel (0) target = $region29
    $region28: #{tpu_custom_call.1} parent=1 // pred_region
      _
    $region29: #{tpu_custom_call.1} parent=1 // pred_fallthru
      _
    // Predicated region
    $region30: #{tpu_custom_call.1} parent=1 // pred_check
      _
    $region31: #{tpu_custom_call.1} parent=1 // pred_check_branch
      %32 = sbr.rel (0) target = $region33
    $region32: #{tpu_custom_call.1} parent=1 // pred_region
      _
    $region33: #{tpu_custom_call.1} parent=1 // pred_fallthru
      _
    // Predicated region
    $region34: #{tpu_custom_call.1} parent=1 // pred_check
      _
    $region35: #{tpu_custom_call.1} parent=1 // pred_check_branch
      %34 = sbr.rel (0) target = $region37
    $region36: #{tpu_custom_call.1} parent=1 // pred_region
      _
    $region37: #{tpu_custom_call.1} parent=1 // pred_fallthru
      _
    // Predicated region
    $region38: #{tpu_custom_call.1} parent=1 // pred_check
      _
    $region39: #{tpu_custom_call.1} parent=1 // pred_check_branch
      %36 = sbr.rel (0) target = $region41
    $region40: #{tpu_custom_call.1} parent=1 // pred_region
      _
    $region41: #{tpu_custom_call.1} parent=1 // pred_fallthru
      _
    // Predicated region
    $region42: #{tpu_custom_call.1} parent=1 // pred_check
      _
    $region43: #{tpu_custom_call.1} parent=1 // pred_check_branch
      %38 = sbr.rel (0) target = $region45
    $region44: #{tpu_custom_call.1} parent=1 // pred_region
      _
    $region45: #{tpu_custom_call.1} parent=1 // pred_fallthru
      _
    %v39 = vld [vmem:[%s10] sm:$0x1]
    %v40 = vld [vmem:[%s2] sm:$0xff]
    %v41 = vld [vmem:[%s2 + $0x8] sm:$0xff]
    %v42 = vld [vmem:[%s2 + $0x10] sm:$0xff]
    %v43 = vld [vmem:[%s2 + $0x18] sm:$0xff]
    %v44 = vld [vmem:[%s2 + $0x20] sm:$0xff]
    %v45 = vld [vmem:[%s2 + $0x28] sm:$0xff]
    %v46 = vld [vmem:[%s2 + $0x30] sm:$0xff]
    %v47 = vld [vmem:[%s2 + $0x38] sm:$0xff]
    %v48 = vld [vmem:[%s2 + $0x40] sm:$0xff]
    %v49 = vld [vmem:[%s2 + $0x48] sm:$0xff]
    %v50 = vld [vmem:[%s2 + $0x50] sm:$0xff]
    %v51 = vld [vmem:[%s2 + $0x58] sm:$0xff]
    %v52 = vld [vmem:[%s2 + $0x60] sm:$0xff]
    %v53 = vld [vmem:[%s2 + $0x68] sm:$0xff]
    %v54 = vld [vmem:[%s1] sm:$0xff]
    %v55 = vld [vmem:[%s1 + $0x8] sm:$0xff]
    %v56 = vld [vmem:[%s1 + $0x10] sm:$0xff]
    %v57 = vld [vmem:[%s1 + $0x18] sm:$0xff]
    %v58 = vld [vmem:[%s1 + $0x20] sm:$0xff]
    %v59 = vld [vmem:[%s1 + $0x28] sm:$0xff]
    %v60 = vld [vmem:[%s1 + $0x30] sm:$0xff]
    %v61 = vld [vmem:[%s1 + $0x38] sm:$0xff]
    %v62 = vld [vmem:[%s1 + $0x40] sm:$0xff]
    %v63 = vld [vmem:[%s1 + $0x48] sm:$0xff]
    %v64 = vld [vmem:[%s1 + $0x50] sm:$0xff]
    %v65 = vld [vmem:[%s1 + $0x58] sm:$0xff]
    %v66 = vld [vmem:[%s1 + $0x60] sm:$0xff]
    %v67 = vld [vmem:[%s1 + $0x68] sm:$0xff]
    %v68 = vld [vmem:[%s1 + $0x70] sm:$0xff]
    %v69 = vld [vmem:[%s1 + $0x78] sm:$0xff]
    %v70 = vld [vmem:[%s1 + $0x80] sm:$0xff]
    %v71 = vld [vmem:[%s1 + $0x88] sm:$0xff]
    %v72 = vld [vmem:[%s1 + $0x90] sm:$0xff]
    %v73 = vld [vmem:[%s1 + $0x98] sm:$0xff]
    %v74 = vld [vmem:[%s1 + $0xa0] sm:$0xff]
    %v75 = vld [vmem:[%s7] sm:$0xff]
    %v76 = vld [vmem:[%s7 + $0x8] sm:$0xff]
    %v77 = vld [vmem:[%s7 + $0x10] sm:$0xff]
    %v78 = vld [vmem:[%s7 + $0x18] sm:$0xff]
    %v79 = vld [vmem:[%s7 + $0x20] sm:$0xff]
    %v80 = vld [vmem:[%s7 + $0x28] sm:$0xff]
    %v81 = vld [vmem:[%s7 + $0x30] sm:$0xff]
    %83 = vset.pattern.permute.xlu0 0
    %84 = vperm.xlu0 %83, %v75
    %v85 = vpop.permute.xlu0 %84
    %88 = vset.pattern.permute.xlu0 0
    %89 = vperm.xlu0 %88, %v76
    %v90 = vpop.permute.xlu0 %89
    %93 = vset.pattern.permute.xlu0 0
    %94 = vperm.xlu0 %93, %v77
    %v95 = vpop.permute.xlu0 %94
    %98 = vset.pattern.permute.xlu0 0
    %99 = vperm.xlu0 %98, %v78
    %v100 = vpop.permute.xlu0 %99
    %103 = vset.pattern.permute.xlu0 0
    %104 = vperm.xlu0 %103, %v79
    %v105 = vpop.permute.xlu0 %104
    %108 = vset.pattern.permute.xlu0 0
    %109 = vperm.xlu0 %108, %v80
    %v110 = vpop.permute.xlu0 %109
    %113 = vset.pattern.permute.xlu0 0
    %114 = vperm.xlu0 %113, %v81
    %v115 = vpop.permute.xlu0 %114
    %vm117 = vcmask 326656
    %v119 = vsel %vm117, %v41, 0
    %v122 = vsel %vm117, %v43, 0
    %v125 = vsel %vm117, %v45, 0
    %v128 = vsel %vm117, %v47, 0
    %v131 = vsel %vm117, %v49, 0
    %v134 = vsel %vm117, %v51, 0
    %v137 = vsel %vm117, %v53, 0
    %139 = vmatprep.subr.mxu0 0.0
    %140 = vmatpush1.msra.mxu0 %v69
    %141 = vmatprep.subr.mxu0 0.0
    %142 = vmatpush1.msra.mxu0 %v68
    %143 = vmatprep.subr.mxu0 0.0
    %144 = vmatpush1.msra.mxu0 %v67
    %145 = vmatprep.subr.mxu0 0.0
    %146 = vmatpush1.msra.mxu0 %v66
    %147 = vmatprep.subr.mxu0 0.0
    %148 = vmatpush1.msra.mxu0 %v65
    %149 = vmatprep.subr.mxu0 0.0
    %150 = vmatpush1.msra.mxu0 %v64
    %151 = vmatprep.subr.mxu0 0.0
    %152 = vmatpush1.msra.mxu0 %v63
    %153 = vmatprep.subr.mxu0 0.0
    %154 = vmatpush1.msra.mxu0 %v62
    %155 = vmatprep.subr.mxu0 0.0
    %156 = vmatpush1.msra.mxu0 %v61
    %157 = vmatprep.subr.mxu0 0.0
    %158 = vmatpush1.msra.mxu0 %v60
    %159 = vmatprep.subr.mxu0 0.0
    %160 = vmatpush1.msra.mxu0 %v59
    %161 = vmatprep.subr.mxu0 0.0
    %162 = vmatpush1.msra.mxu0 %v58
    %163 = vmatprep.subr.mxu0 0.0
    %164 = vmatpush1.msra.mxu0 %v57
    %165 = vmatprep.subr.mxu0 0.0
    %166 = vmatpush1.msra.mxu0 %v56
    %167 = vmatprep.subr.mxu0 0.0
    %168 = vmatpush1.msra.mxu0 %v55
    %169 = vmatprep.subr.mxu0 0.0
    %170 = vmatpush1.msra.mxu0 %v54
    %171 = vmatprep.subr.mxu0 0.0
    %172 = vmatpush2.msra.mxu0 0.0
    %173 = vmatprep.subr.mxu0 0.0
    %174 = vmatpush2.msra.mxu0 0.0
    %175 = vmatprep.subr.mxu0 0.0
    %176 = vmatpush2.msra.mxu0 0.0
    %177 = vmatprep.subr.mxu0 0.0
    %178 = vmatpush2.msra.mxu0 0.0
    %179 = vmatprep.subr.mxu0 0.0
    %180 = vmatpush2.msra.mxu0 0.0
    %181 = vmatprep.subr.mxu0 0.0
    %182 = vmatpush2.msra.mxu0 0.0
    %183 = vmatprep.subr.mxu0 0.0
    %184 = vmatpush2.msra.mxu0 0.0
    %185 = vmatprep.subr.mxu0 0.0
    %186 = vmatpush2.msra.mxu0 0.0
    %187 = vmatprep.subr.mxu0 0.0
    %188 = vmatpush2.msra.mxu0 0.0
    %189 = vmatprep.subr.mxu0 0.0
    %190 = vmatpush2.msra.mxu0 0.0
    %191 = vmatprep.subr.mxu0 0.0
    %192 = vmatpush2.msra.mxu0 0.0
    %193 = vmatprep.subr.mxu0 0.0
    %194 = vmatpush2.msra.mxu0 %v74
    %195 = vmatprep.subr.mxu0 0.0
    %196 = vmatpush2.msra.mxu0 %v73
    %197 = vmatprep.subr.mxu0 0.0
    %198 = vmatpush2.msra.mxu0 %v72
    %199 = vmatprep.subr.mxu0 0.0
    %200 = vmatpush2.msra.mxu0 %v71
    %201 = vmatprep.subr.mxu0 0.0
    %202 = vmatpush2.msra.mxu0 %v70
    %203 = vmatprep.mubr.f32.mxu0 %v119
    %204 = vmatmul.mubr.f32.gmra.mxu0 %v40
    %v205 = vpop.f32.mrf.mxu0
    %v206 = vadd.f32 %v85, %v205
    %v207 = vpop.f32.mrf.mxu0
    %208 = vmatprep.mubr.f32.mxu0 %v122
    %209 = vmatmul.mubr.f32.gmra.mxu0 %v42
    %v210 = vpop.f32.mrf.mxu0
    %v211 = vadd.f32 %v90, %v210
    %v212 = vpop.f32.mrf.mxu0
    %213 = vmatprep.mubr.f32.mxu0 %v125
    %214 = vmatmul.mubr.f32.gmra.mxu0 %v44
    %v215 = vpop.f32.mrf.mxu0
    %v216 = vadd.f32 %v95, %v215
    %v217 = vpop.f32.mrf.mxu0
    %218 = vmatprep.mubr.f32.mxu0 %v128
    %219 = vmatmul.mubr.f32.gmra.mxu0 %v46
    %v220 = vpop.f32.mrf.mxu0
    %v221 = vadd.f32 %v100, %v220
    %v222 = vpop.f32.mrf.mxu0
    %223 = vmatprep.mubr.f32.mxu0 %v131
    %224 = vmatmul.mubr.f32.gmra.mxu0 %v48
    %v225 = vpop.f32.mrf.mxu0
    %v226 = vadd.f32 %v105, %v225
    %v227 = vpop.f32.mrf.mxu0
    %228 = vmatprep.mubr.f32.mxu0 %v134
    %229 = vmatmul.mubr.f32.gmra.mxu0 %v50
    %v230 = vpop.f32.mrf.mxu0
    %v231 = vadd.f32 %v110, %v230
    %v232 = vpop.f32.mrf.mxu0
    %233 = vmatprep.mubr.f32.mxu0 %v137
    %234 = vmatmul.mubr.f32.gmra.mxu0 %v52
    %v235 = vpop.f32.mrf.mxu0
    %v236 = vadd.f32 %v115, %v235
    %v237 = vpop.f32.mrf.mxu0
    %238 = vdwg.mxu0
    %v239 = vld [vmem:[%s0] sm:$0xff]
    %240 = vst [vmem:[#allocation2] sm:$0xff] %v239
    %v241 = vmax.f32 %v206, 0.0
    %v243 = vlaneseq
    %v244 = vshrl.u32 %v243, 7
    %v245 = vsub.s32 0, %v244
    %v246 = vrot.slane %v39, %v245
    %v248 = vmul.f32 %v241, %v246
    %249 = vst [vmem:[#allocation2 + $0x8] sm:$0xff] %v248
    %250 = vrot.lane.b32.xlu0 %v248, 2
    %v251 = vpop.permute.xlu0 %250
    %252 = vrot.lane.b32.xlu0 %v248, 126
    %v253 = vpop.permute.xlu0 %252
    %v254 = vld [vmem:[%s3] sm:$0xff]
    %vm255 = vcmask 195584
    %v257 = vsel %vm255, %v254, 0
    %259 = vmatprep.subr.mxu0 0.0
    %260 = vmatpush1.msra.mxu0 0.0
    %261 = vmatprep.subr.mxu0 0.0
    %262 = vmatpush1.msra.mxu0 0.0
    %263 = vmatprep.subr.mxu0 0.0
    %264 = vmatpush1.msra.mxu0 0.0
    %265 = vmatprep.subr.mxu0 0.0
    %266 = vmatpush1.msra.mxu0 0.0
    %267 = vmatprep.subr.mxu0 0.0
    %268 = vmatpush1.msra.mxu0 0.0
    %269 = vmatprep.subr.mxu0 0.0
    %270 = vmatpush1.msra.mxu0 0.0
    %271 = vmatprep.subr.mxu0 0.0
    %272 = vmatpush1.msra.mxu0 0.0
    %273 = vmatprep.subr.mxu0 0.0
    %274 = vmatpush1.msra.mxu0 0.0
    %275 = vmatprep.subr.mxu0 0.0
    %276 = vmatpush1.msra.mxu0 0.0
    %277 = vmatprep.subr.mxu0 0.0
    %278 = vmatpush1.msra.mxu0 0.0
    %279 = vmatprep.subr.mxu0 0.0
    %280 = vmatpush1.msra.mxu0 0.0
    %281 = vmatprep.subr.mxu0 0.0
    %282 = vmatpush1.msra.mxu0 0.0
    %283 = vmatprep.subr.mxu0 0.0
    %284 = vmatpush1.msra.mxu0 0.0
    %285 = vmatprep.subr.mxu0 0.0
    %286 = vmatpush1.msra.mxu0 %v253
    %287 = vmatprep.subr.mxu0 0.0
    %288 = vmatpush1.msra.mxu0 %v248
    %289 = vmatprep.subr.mxu0 0.0
    %290 = vmatpush1.msra.mxu0 %v251
    %291 = vmatprep.subr.mxu0 0.0
    %292 = vmatpush2.msra.mxu0 0.0
    %293 = vmatprep.subr.mxu0 0.0
    %294 = vmatpush2.msra.mxu0 0.0
    %295 = vmatprep.subr.mxu0 0.0
    %296 = vmatpush2.msra.mxu0 0.0
    %297 = vmatprep.subr.mxu0 0.0
    %298 = vmatpush2.msra.mxu0 0.0
    %299 = vmatprep.subr.mxu0 0.0
    %300 = vmatpush2.msra.mxu0 0.0
    %301 = vmatprep.subr.mxu0 0.0
    %302 = vmatpush2.msra.mxu0 0.0
    %303 = vmatprep.subr.mxu0 0.0
    %304 = vmatpush2.msra.mxu0 0.0
    %305 = vmatprep.subr.mxu0 0.0
    %306 = vmatpush2.msra.mxu0 0.0
    %307 = vmatprep.subr.mxu0 0.0
    %308 = vmatpush2.msra.mxu0 0.0
    %309 = vmatprep.subr.mxu0 0.0
    %310 = vmatpush2.msra.mxu0 0.0
    %311 = vmatprep.subr.mxu0 0.0
    %312 = vmatpush2.msra.mxu0 0.0
    %313 = vmatprep.subr.mxu0 0.0
    %314 = vmatpush2.msra.mxu0 0.0
    %315 = vmatprep.subr.mxu0 0.0
    %316 = vmatpush2.msra.mxu0 0.0
    %317 = vmatprep.subr.mxu0 0.0
    %318 = vmatpush2.msra.mxu0 0.0
    %319 = vmatprep.subr.mxu0 0.0
    %320 = vmatpush2.msra.mxu0 0.0
    %321 = vmatprep.subr.mxu0 0.0
    %322 = vmatpush2.msra.mxu0 0.0
    %323 = vmatprep.mubr.f32.mxu0 0.0
    %324 = vmatmul.mubr.f32.gmra.mxu0 %v257
    %v325 = vpop.f32.mrf.mxu0
    %v326 = vadd.f32 0.0, %v325
    %v327 = vpop.f32.mrf.mxu0
    %328 = vdwg.mxu0
    %v329 = vadd.f32 %v211, %v326
    %v330 = vmax.f32 %v329, 0.0
    %v331 = vmul.f32 %v330, %v246
    %332 = vst [vmem:[#allocation2 + $0x10] sm:$0xff] %v331
    %333 = vrot.lane.b32.xlu0 %v331, 2
    %v334 = vpop.permute.xlu0 %333
    %335 = vrot.lane.b32.xlu0 %v331, 126
    %v336 = vpop.permute.xlu0 %335
    %v337 = vld [vmem:[%s3 + $0x8] sm:$0xff]
    %v339 = vsel %vm255, %v337, 0
    %341 = vmatprep.subr.mxu0 0.0
    %342 = vmatpush1.msra.mxu0 0.0
    %343 = vmatprep.subr.mxu0 0.0
    %344 = vmatpush1.msra.mxu0 0.0
    %345 = vmatprep.subr.mxu0 0.0
    %346 = vmatpush1.msra.mxu0 0.0
    %347 = vmatprep.subr.mxu0 0.0
    %348 = vmatpush1.msra.mxu0 0.0
    %349 = vmatprep.subr.mxu0 0.0
    %350 = vmatpush1.msra.mxu0 0.0
    %351 = vmatprep.subr.mxu0 0.0
    %352 = vmatpush1.msra.mxu0 0.0
    %353 = vmatprep.subr.mxu0 0.0
    %354 = vmatpush1.msra.mxu0 0.0
    %355 = vmatprep.subr.mxu0 0.0
    %356 = vmatpush1.msra.mxu0 0.0
    %357 = vmatprep.subr.mxu0 0.0
    %358 = vmatpush1.msra.mxu0 0.0
    %359 = vmatprep.subr.mxu0 0.0
    %360 = vmatpush1.msra.mxu0 0.0
    %361 = vmatprep.subr.mxu0 0.0
    %362 = vmatpush1.msra.mxu0 0.0
    %363 = vmatprep.subr.mxu0 0.0
    %364 = vmatpush1.msra.mxu0 0.0
    %365 = vmatprep.subr.mxu0 0.0
    %366 = vmatpush1.msra.mxu0 0.0
    %367 = vmatprep.subr.mxu0 0.0
    %368 = vmatpush1.msra.mxu0 %v336
    %369 = vmatprep.subr.mxu0 0.0
    %370 = vmatpush1.msra.mxu0 %v331
    %371 = vmatprep.subr.mxu0 0.0
    %372 = vmatpush1.msra.mxu0 %v334
    %373 = vmatprep.subr.mxu0 0.0
    %374 = vmatpush2.msra.mxu0 0.0
    %375 = vmatprep.subr.mxu0 0.0
    %376 = vmatpush2.msra.mxu0 0.0
    %377 = vmatprep.subr.mxu0 0.0
    %378 = vmatpush2.msra.mxu0 0.0
    %379 = vmatprep.subr.mxu0 0.0
    %380 = vmatpush2.msra.mxu0 0.0
    %381 = vmatprep.subr.mxu0 0.0
    %382 = vmatpush2.msra.mxu0 0.0
    %383 = vmatprep.subr.mxu0 0.0
    %384 = vmatpush2.msra.mxu0 0.0
    %385 = vmatprep.subr.mxu0 0.0
    %386 = vmatpush2.msra.mxu0 0.0
    %387 = vmatprep.subr.mxu0 0.0
    %388 = vmatpush2.msra.mxu0 0.0
    %389 = vmatprep.subr.mxu0 0.0
    %390 = vmatpush2.msra.mxu0 0.0
    %391 = vmatprep.subr.mxu0 0.0
    %392 = vmatpush2.msra.mxu0 0.0
    %393 = vmatprep.subr.mxu0 0.0
    %394 = vmatpush2.msra.mxu0 0.0
    %395 = vmatprep.subr.mxu0 0.0
    %396 = vmatpush2.msra.mxu0 0.0
    %397 = vmatprep.subr.mxu0 0.0
    %398 = vmatpush2.msra.mxu0 0.0
    %399 = vmatprep.subr.mxu0 0.0
    %400 = vmatpush2.msra.mxu0 0.0
    %401 = vmatprep.subr.mxu0 0.0
    %402 = vmatpush2.msra.mxu0 0.0
    %403 = vmatprep.subr.mxu0 0.0
    %404 = vmatpush2.msra.mxu0 0.0
    %405 = vmatprep.mubr.f32.mxu0 0.0
    %406 = vmatmul.mubr.f32.gmra.mxu0 %v339
    %v407 = vpop.f32.mrf.mxu0
    %v408 = vadd.f32 0.0, %v407
    %v409 = vpop.f32.mrf.mxu0
    %410 = vdwg.mxu0
    %v411 = vadd.f32 %v216, %v408
    %v412 = vmax.f32 %v411, 0.0
    %v413 = vmul.f32 %v412, %v246
    %414 = vst [vmem:[#allocation2 + $0x18] sm:$0xff] %v413
    %415 = vrot.lane.b32.xlu0 %v413, 2
    %v416 = vpop.permute.xlu0 %415
    %417 = vrot.lane.b32.xlu0 %v413, 126
    %v418 = vpop.permute.xlu0 %417
    %v419 = vld [vmem:[%s3 + $0x10] sm:$0xff]
    %v421 = vsel %vm255, %v419, 0
    %423 = vmatprep.subr.mxu0 0.0
    %424 = vmatpush1.msra.mxu0 0.0
    %425 = vmatprep.subr.mxu0 0.0
    %426 = vmatpush1.msra.mxu0 0.0
    %427 = vmatprep.subr.mxu0 0.0
    %428 = vmatpush1.msra.mxu0 0.0
    %429 = vmatprep.subr.mxu0 0.0
    %430 = vmatpush1.msra.mxu0 0.0
    %431 = vmatprep.subr.mxu0 0.0
    %432 = vmatpush1.msra.mxu0 0.0
    %433 = vmatprep.subr.mxu0 0.0
    %434 = vmatpush1.msra.mxu0 0.0
    %435 = vmatprep.subr.mxu0 0.0
    %436 = vmatpush1.msra.mxu0 0.0
    %437 = vmatprep.subr.mxu0 0.0
    %438 = vmatpush1.msra.mxu0 0.0
    %439 = vmatprep.subr.mxu0 0.0
    %440 = vmatpush1.msra.mxu0 0.0
    %441 = vmatprep.subr.mxu0 0.0
    %442 = vmatpush1.msra.mxu0 0.0
    %443 = vmatprep.subr.mxu0 0.0
    %444 = vmatpush1.msra.mxu0 0.0
    %445 = vmatprep.subr.mxu0 0.0
    %446 = vmatpush1.msra.mxu0 0.0
    %447 = vmatprep.subr.mxu0 0.0
    %448 = vmatpush1.msra.mxu0 0.0
    %449 = vmatprep.subr.mxu0 0.0
    %450 = vmatpush1.msra.mxu0 %v418
    %451 = vmatprep.subr.mxu0 0.0
    %452 = vmatpush1.msra.mxu0 %v413
    %453 = vmatprep.subr.mxu0 0.0
    %454 = vmatpush1.msra.mxu0 %v416
    %455 = vmatprep.subr.mxu0 0.0
    %456 = vmatpush2.msra.mxu0 0.0
    %457 = vmatprep.subr.mxu0 0.0
    %458 = vmatpush2.msra.mxu0 0.0
    %459 = vmatprep.subr.mxu0 0.0
    %460 = vmatpush2.msra.mxu0 0.0
    %461 = vmatprep.subr.mxu0 0.0
    %462 = vmatpush2.msra.mxu0 0.0
    %463 = vmatprep.subr.mxu0 0.0
    %464 = vmatpush2.msra.mxu0 0.0
    %465 = vmatprep.subr.mxu0 0.0
    %466 = vmatpush2.msra.mxu0 0.0
    %467 = vmatprep.subr.mxu0 0.0
    %468 = vmatpush2.msra.mxu0 0.0
    %469 = vmatprep.subr.mxu0 0.0
    %470 = vmatpush2.msra.mxu0 0.0
    %471 = vmatprep.subr.mxu0 0.0
    %472 = vmatpush2.msra.mxu0 0.0
    %473 = vmatprep.subr.mxu0 0.0
    %474 = vmatpush2.msra.mxu0 0.0
    %475 = vmatprep.subr.mxu0 0.0
    %476 = vmatpush2.msra.mxu0 0.0
    %477 = vmatprep.subr.mxu0 0.0
    %478 = vmatpush2.msra.mxu0 0.0
    %479 = vmatprep.subr.mxu0 0.0
    %480 = vmatpush2.msra.mxu0 0.0
    %481 = vmatprep.subr.mxu0 0.0
    %482 = vmatpush2.msra.mxu0 0.0
    %483 = vmatprep.subr.mxu0 0.0
    %484 = vmatpush2.msra.mxu0 0.0
    %485 = vmatprep.subr.mxu0 0.0
    %486 = vmatpush2.msra.mxu0 0.0
    %487 = vmatprep.mubr.f32.mxu0 0.0
    %488 = vmatmul.mubr.f32.gmra.mxu0 %v421
    %v489 = vpop.f32.mrf.mxu0
    %v490 = vadd.f32 0.0, %v489
    %v491 = vpop.f32.mrf.mxu0
    %492 = vdwg.mxu0
    %v493 = vadd.f32 %v221, %v490
    %v494 = vmax.f32 %v493, 0.0
    %v495 = vmul.f32 %v494, %v246
    %496 = vst [vmem:[#allocation2 + $0x20] sm:$0xff] %v495
    %497 = vrot.lane.b32.xlu0 %v495, 2
    %v498 = vpop.permute.xlu0 %497
    %499 = vrot.lane.b32.xlu0 %v495, 126
    %v500 = vpop.permute.xlu0 %499
    %v501 = vld [vmem:[%s3 + $0x18] sm:$0xff]
    %v503 = vsel %vm255, %v501, 0
    %505 = vmatprep.subr.mxu0 0.0
    %506 = vmatpush1.msra.mxu0 0.0
    %507 = vmatprep.subr.mxu0 0.0
    %508 = vmatpush1.msra.mxu0 0.0
    %509 = vmatprep.subr.mxu0 0.0
    %510 = vmatpush1.msra.mxu0 0.0
    %511 = vmatprep.subr.mxu0 0.0
    %512 = vmatpush1.msra.mxu0 0.0
    %513 = vmatprep.subr.mxu0 0.0
    %514 = vmatpush1.msra.mxu0 0.0
    %515 = vmatprep.subr.mxu0 0.0
    %516 = vmatpush1.msra.mxu0 0.0
    %517 = vmatprep.subr.mxu0 0.0
    %518 = vmatpush1.msra.mxu0 0.0
    %519 = vmatprep.subr.mxu0 0.0
    %520 = vmatpush1.msra.mxu0 0.0
    %521 = vmatprep.subr.mxu0 0.0
    %522 = vmatpush1.msra.mxu0 0.0
    %523 = vmatprep.subr.mxu0 0.0
    %524 = vmatpush1.msra.mxu0 0.0
    %525 = vmatprep.subr.mxu0 0.0
    %526 = vmatpush1.msra.mxu0 0.0
    %527 = vmatprep.subr.mxu0 0.0
    %528 = vmatpush1.msra.mxu0 0.0
    %529 = vmatprep.subr.mxu0 0.0
    %530 = vmatpush1.msra.mxu0 0.0
    %531 = vmatprep.subr.mxu0 0.0
    %532 = vmatpush1.msra.mxu0 %v500
    %533 = vmatprep.subr.mxu0 0.0
    %534 = vmatpush1.msra.mxu0 %v495
    %535 = vmatprep.subr.mxu0 0.0
    %536 = vmatpush1.msra.mxu0 %v498
    %537 = vmatprep.subr.mxu0 0.0
    %538 = vmatpush2.msra.mxu0 0.0
    %539 = vmatprep.subr.mxu0 0.0
    %540 = vmatpush2.msra.mxu0 0.0
    %541 = vmatprep.subr.mxu0 0.0
    %542 = vmatpush2.msra.mxu0 0.0
    %543 = vmatprep.subr.mxu0 0.0
    %544 = vmatpush2.msra.mxu0 0.0
    %545 = vmatprep.subr.mxu0 0.0
    %546 = vmatpush2.msra.mxu0 0.0
    %547 = vmatprep.subr.mxu0 0.0
    %548 = vmatpush2.msra.mxu0 0.0
    %549 = vmatprep.subr.mxu0 0.0
    %550 = vmatpush2.msra.mxu0 0.0
    %551 = vmatprep.subr.mxu0 0.0
    %552 = vmatpush2.msra.mxu0 0.0
    %553 = vmatprep.subr.mxu0 0.0
    %554 = vmatpush2.msra.mxu0 0.0
    %555 = vmatprep.subr.mxu0 0.0
    %556 = vmatpush2.msra.mxu0 0.0
    %557 = vmatprep.subr.mxu0 0.0
    %558 = vmatpush2.msra.mxu0 0.0
    %559 = vmatprep.subr.mxu0 0.0
    %560 = vmatpush2.msra.mxu0 0.0
    %561 = vmatprep.subr.mxu0 0.0
    %562 = vmatpush2.msra.mxu0 0.0
    %563 = vmatprep.subr.mxu0 0.0
    %564 = vmatpush2.msra.mxu0 0.0
    %565 = vmatprep.subr.mxu0 0.0
    %566 = vmatpush2.msra.mxu0 0.0
    %567 = vmatprep.subr.mxu0 0.0
    %568 = vmatpush2.msra.mxu0 0.0
    %569 = vmatprep.mubr.f32.mxu0 0.0
    %570 = vmatmul.mubr.f32.gmra.mxu0 %v503
    %v571 = vpop.f32.mrf.mxu0
    %v572 = vadd.f32 0.0, %v571
    %v573 = vpop.f32.mrf.mxu0
    %574 = vdwg.mxu0
    %v575 = vadd.f32 %v226, %v572
    %v576 = vmax.f32 %v575, 0.0
    %v577 = vmul.f32 %v576, %v246
    %578 = vst [vmem:[#allocation2 + $0x28] sm:$0xff] %v577
    %579 = vrot.lane.b32.xlu0 %v577, 2
    %v580 = vpop.permute.xlu0 %579
    %581 = vrot.lane.b32.xlu0 %v577, 126
    %v582 = vpop.permute.xlu0 %581
    %v583 = vld [vmem:[%s3 + $0x20] sm:$0xff]
    %v585 = vsel %vm255, %v583, 0
    %587 = vmatprep.subr.mxu0 0.0
    %588 = vmatpush1.msra.mxu0 0.0
    %589 = vmatprep.subr.mxu0 0.0
    %590 = vmatpush1.msra.mxu0 0.0
    %591 = vmatprep.subr.mxu0 0.0
    %592 = vmatpush1.msra.mxu0 0.0
    %593 = vmatprep.subr.mxu0 0.0
    %594 = vmatpush1.msra.mxu0 0.0
    %595 = vmatprep.subr.mxu0 0.0
    %596 = vmatpush1.msra.mxu0 0.0
    %597 = vmatprep.subr.mxu0 0.0
    %598 = vmatpush1.msra.mxu0 0.0
    %599 = vmatprep.subr.mxu0 0.0
    %600 = vmatpush1.msra.mxu0 0.0
    %601 = vmatprep.subr.mxu0 0.0
    %602 = vmatpush1.msra.mxu0 0.0
    %603 = vmatprep.subr.mxu0 0.0
    %604 = vmatpush1.msra.mxu0 0.0
    %605 = vmatprep.subr.mxu0 0.0
    %606 = vmatpush1.msra.mxu0 0.0
    %607 = vmatprep.subr.mxu0 0.0
    %608 = vmatpush1.msra.mxu0 0.0
    %609 = vmatprep.subr.mxu0 0.0
    %610 = vmatpush1.msra.mxu0 0.0
    %611 = vmatprep.subr.mxu0 0.0
    %612 = vmatpush1.msra.mxu0 0.0
    %613 = vmatprep.subr.mxu0 0.0
    %614 = vmatpush1.msra.mxu0 %v582
    %615 = vmatprep.subr.mxu0 0.0
    %616 = vmatpush1.msra.mxu0 %v577
    %617 = vmatprep.subr.mxu0 0.0
    %618 = vmatpush1.msra.mxu0 %v580
    %619 = vmatprep.subr.mxu0 0.0
    %620 = vmatpush2.msra.mxu0 0.0
    %621 = vmatprep.subr.mxu0 0.0
    %622 = vmatpush2.msra.mxu0 0.0
    %623 = vmatprep.subr.mxu0 0.0
    %624 = vmatpush2.msra.mxu0 0.0
    %625 = vmatprep.subr.mxu0 0.0
    %626 = vmatpush2.msra.mxu0 0.0
    %627 = vmatprep.subr.mxu0 0.0
    %628 = vmatpush2.msra.mxu0 0.0
    %629 = vmatprep.subr.mxu0 0.0
    %630 = vmatpush2.msra.mxu0 0.0
    %631 = vmatprep.subr.mxu0 0.0
    %632 = vmatpush2.msra.mxu0 0.0
    %633 = vmatprep.subr.mxu0 0.0
    %634 = vmatpush2.msra.mxu0 0.0
    %635 = vmatprep.subr.mxu0 0.0
    %636 = vmatpush2.msra.mxu0 0.0
    %637 = vmatprep.subr.mxu0 0.0
    %638 = vmatpush2.msra.mxu0 0.0
    %639 = vmatprep.subr.mxu0 0.0
    %640 = vmatpush2.msra.mxu0 0.0
    %641 = vmatprep.subr.mxu0 0.0
    %642 = vmatpush2.msra.mxu0 0.0
    %643 = vmatprep.subr.mxu0 0.0
    %644 = vmatpush2.msra.mxu0 0.0
    %645 = vmatprep.subr.mxu0 0.0
    %646 = vmatpush2.msra.mxu0 0.0
    %647 = vmatprep.subr.mxu0 0.0
    %648 = vmatpush2.msra.mxu0 0.0
    %649 = vmatprep.subr.mxu0 0.0
    %650 = vmatpush2.msra.mxu0 0.0
    %651 = vmatprep.mubr.f32.mxu0 0.0
    %652 = vmatmul.mubr.f32.gmra.mxu0 %v585
    %v653 = vpop.f32.mrf.mxu0
    %v654 = vadd.f32 0.0, %v653
    %v655 = vpop.f32.mrf.mxu0
    %656 = vdwg.mxu0
    %v657 = vadd.f32 %v231, %v654
    %v658 = vmax.f32 %v657, 0.0
    %v659 = vmul.f32 %v658, %v246
    %660 = vst [vmem:[#allocation2 + $0x30] sm:$0xff] %v659
    %661 = vrot.lane.b32.xlu0 %v659, 2
    %v662 = vpop.permute.xlu0 %661
    %663 = vrot.lane.b32.xlu0 %v659, 126
    %v664 = vpop.permute.xlu0 %663
    %v665 = vld [vmem:[%s3 + $0x28] sm:$0xff]
    %v667 = vsel %vm255, %v665, 0
    %669 = vmatprep.subr.mxu0 0.0
    %670 = vmatpush1.msra.mxu0 0.0
    %671 = vmatprep.subr.mxu0 0.0
    %672 = vmatpush1.msra.mxu0 0.0
    %673 = vmatprep.subr.mxu0 0.0
    %674 = vmatpush1.msra.mxu0 0.0
    %675 = vmatprep.subr.mxu0 0.0
    %676 = vmatpush1.msra.mxu0 0.0
    %677 = vmatprep.subr.mxu0 0.0
    %678 = vmatpush1.msra.mxu0 0.0
    %679 = vmatprep.subr.mxu0 0.0
    %680 = vmatpush1.msra.mxu0 0.0
    %681 = vmatprep.subr.mxu0 0.0
    %682 = vmatpush1.msra.mxu0 0.0
    %683 = vmatprep.subr.mxu0 0.0
    %684 = vmatpush1.msra.mxu0 0.0
    %685 = vmatprep.subr.mxu0 0.0
    %686 = vmatpush1.msra.mxu0 0.0
    %687 = vmatprep.subr.mxu0 0.0
    %688 = vmatpush1.msra.mxu0 0.0
    %689 = vmatprep.subr.mxu0 0.0
    %690 = vmatpush1.msra.mxu0 0.0
    %691 = vmatprep.subr.mxu0 0.0
    %692 = vmatpush1.msra.mxu0 0.0
    %693 = vmatprep.subr.mxu0 0.0
    %694 = vmatpush1.msra.mxu0 0.0
    %695 = vmatprep.subr.mxu0 0.0
    %696 = vmatpush1.msra.mxu0 %v664
    %697 = vmatprep.subr.mxu0 0.0
    %698 = vmatpush1.msra.mxu0 %v659
    %699 = vmatprep.subr.mxu0 0.0
    %700 = vmatpush1.msra.mxu0 %v662
    %701 = vmatprep.subr.mxu0 0.0
    %702 = vmatpush2.msra.mxu0 0.0
    %703 = vmatprep.subr.mxu0 0.0
    %704 = vmatpush2.msra.mxu0 0.0
    %705 = vmatprep.subr.mxu0 0.0
    %706 = vmatpush2.msra.mxu0 0.0
    %707 = vmatprep.subr.mxu0 0.0
    %708 = vmatpush2.msra.mxu0 0.0
    %709 = vmatprep.subr.mxu0 0.0
    %710 = vmatpush2.msra.mxu0 0.0
    %711 = vmatprep.subr.mxu0 0.0
    %712 = vmatpush2.msra.mxu0 0.0
    %713 = vmatprep.subr.mxu0 0.0
    %714 = vmatpush2.msra.mxu0 0.0
    %715 = vmatprep.subr.mxu0 0.0
    %716 = vmatpush2.msra.mxu0 0.0
    %717 = vmatprep.subr.mxu0 0.0
    %718 = vmatpush2.msra.mxu0 0.0
    %719 = vmatprep.subr.mxu0 0.0
    %720 = vmatpush2.msra.mxu0 0.0
    %721 = vmatprep.subr.mxu0 0.0
    %722 = vmatpush2.msra.mxu0 0.0
    %723 = vmatprep.subr.mxu0 0.0
    %724 = vmatpush2.msra.mxu0 0.0
    %725 = vmatprep.subr.mxu0 0.0
    %726 = vmatpush2.msra.mxu0 0.0
    %727 = vmatprep.subr.mxu0 0.0
    %728 = vmatpush2.msra.mxu0 0.0
    %729 = vmatprep.subr.mxu0 0.0
    %730 = vmatpush2.msra.mxu0 0.0
    %731 = vmatprep.subr.mxu0 0.0
    %732 = vmatpush2.msra.mxu0 0.0
    %733 = vmatprep.mubr.f32.mxu0 0.0
    %734 = vmatmul.mubr.f32.gmra.mxu0 %v667
    %v735 = vpop.f32.mrf.mxu0
    %v736 = vadd.f32 0.0, %v735
    %v737 = vpop.f32.mrf.mxu0
    %738 = vdwg.mxu0
    %v739 = vadd.f32 %v236, %v736
    %v740 = vmax.f32 %v739, 0.0
    %v741 = vmul.f32 %v740, %v246
    %742 = vst [vmem:[#allocation2 + $0x38] sm:$0xff] %v741
    %v743 = vld [vmem:[#allocation2] sm:$0xff]
    %v744 = vld [vmem:[#allocation2 + $0x8] sm:$0xff]
    %v745 = vld [vmem:[#allocation2 + $0x10] sm:$0xff]
    %v746 = vld [vmem:[#allocation2 + $0x18] sm:$0xff]
    %v747 = vld [vmem:[#allocation2 + $0x20] sm:$0xff]
    %v748 = vld [vmem:[#allocation2 + $0x28] sm:$0xff]
    %v749 = vld [vmem:[#allocation2 + $0x30] sm:$0xff]
    %v750 = vld [vmem:[#allocation2 + $0x38] sm:$0xff]
    %v751 = vld [vmem:[%s9] sm:$0xff]
    %v752 = vld [vmem:[%s9 + $0x8] sm:$0xff]
    %v753 = vld [vmem:[%s9 + $0x10] sm:$0xff]
    %v754 = vld [vmem:[%s9 + $0x18] sm:$0xff]
    %v755 = vld [vmem:[%s9 + $0x20] sm:$0xff]
    %v756 = vld [vmem:[%s9 + $0x28] sm:$0xff]
    %v757 = vld [vmem:[%s9 + $0x30] sm:$0xff]
    %v758 = vld [vmem:[%s9 + $0x38] sm:$0xff]
    %v759 = vld [vmem:[%s9 + $0x40] sm:$0xff]
    %v760 = vld [vmem:[%s9 + $0x48] sm:$0xff]
    %v761 = vld [vmem:[%s9 + $0x50] sm:$0xff]
    %v762 = vld [vmem:[%s9 + $0x58] sm:$0xff]
    %v763 = vld [vmem:[%s9 + $0x60] sm:$0xff]
    %v764 = vld [vmem:[%s9 + $0x68] sm:$0xff]
    %v765 = vld [vmem:[%s9 + $0x70] sm:$0xff]
    %v766 = vld [vmem:[%s9 + $0x78] sm:$0xff]
    %767 = vmatprep.subr.mxu0 0.0
    %768 = vmatpush1.msra.mxu0 %v766
    %769 = vmatprep.subr.mxu0 0.0
    %770 = vmatpush1.msra.mxu0 %v765
    %771 = vmatprep.subr.mxu0 0.0
    %772 = vmatpush1.msra.mxu0 %v764
    %773 = vmatprep.subr.mxu0 0.0
    %774 = vmatpush1.msra.mxu0 %v763
    %775 = vmatprep.subr.mxu0 0.0
    %776 = vmatpush1.msra.mxu0 %v762
    %777 = vmatprep.subr.mxu0 0.0
    %778 = vmatpush1.msra.mxu0 %v761
    %779 = vmatprep.subr.mxu0 0.0
    %780 = vmatpush1.msra.mxu0 %v760
    %781 = vmatprep.subr.mxu0 0.0
    %782 = vmatpush1.msra.mxu0 %v759
    %783 = vmatprep.subr.mxu0 0.0
    %784 = vmatpush1.msra.mxu0 %v758
    %785 = vmatprep.subr.mxu0 0.0
    %786 = vmatpush1.msra.mxu0 %v757
    %787 = vmatprep.subr.mxu0 0.0
    %788 = vmatpush1.msra.mxu0 %v756
    %789 = vmatprep.subr.mxu0 0.0
    %790 = vmatpush1.msra.mxu0 %v755
    %791 = vmatprep.subr.mxu0 0.0
    %792 = vmatpush1.msra.mxu0 %v754
    %793 = vmatprep.subr.mxu0 0.0
    %794 = vmatpush1.msra.mxu0 %v753
    %795 = vmatprep.subr.mxu0 0.0
    %796 = vmatpush1.msra.mxu0 %v752
    %797 = vmatprep.subr.mxu0 0.0
    %798 = vmatpush1.msra.mxu0 %v751
    %799 = vmatprep.subr.mxu0 0.0
    %800 = vmatpush2.msra.mxu0 0.0
    %801 = vmatprep.subr.mxu0 0.0
    %802 = vmatpush2.msra.mxu0 0.0
    %803 = vmatprep.subr.mxu0 0.0
    %804 = vmatpush2.msra.mxu0 0.0
    %805 = vmatprep.subr.mxu0 0.0
    %806 = vmatpush2.msra.mxu0 0.0
    %807 = vmatprep.subr.mxu0 0.0
    %808 = vmatpush2.msra.mxu0 0.0
    %809 = vmatprep.subr.mxu0 0.0
    %810 = vmatpush2.msra.mxu0 0.0
    %811 = vmatprep.subr.mxu0 0.0
    %812 = vmatpush2.msra.mxu0 0.0
    %813 = vmatprep.subr.mxu0 0.0
    %814 = vmatpush2.msra.mxu0 0.0
    %815 = vmatprep.subr.mxu0 0.0
    %816 = vmatpush2.msra.mxu0 0.0
    %817 = vmatprep.subr.mxu0 0.0
    %818 = vmatpush2.msra.mxu0 0.0
    %819 = vmatprep.subr.mxu0 0.0
    %820 = vmatpush2.msra.mxu0 0.0
    %821 = vmatprep.subr.mxu0 0.0
    %822 = vmatpush2.msra.mxu0 0.0
    %823 = vmatprep.subr.mxu0 0.0
    %824 = vmatpush2.msra.mxu0 0.0
    %825 = vmatprep.subr.mxu0 0.0
    %826 = vmatpush2.msra.mxu0 0.0
    %827 = vmatprep.subr.mxu0 0.0
    %828 = vmatpush2.msra.mxu0 0.0
    %829 = vmatprep.subr.mxu0 0.0
    %830 = vmatpush2.msra.mxu0 0.0
    %831 = vmatprep.mubr.f32.mxu0 0.0
    %832 = vmatmul.mubr.f32.gmra.mxu0 %v743
    %v833 = vpop.f32.mrf.mxu0
    %v834 = vadd.f32 0.0, %v833
    %v835 = vpop.f32.mrf.mxu0
    %836 = vmatprep.mubr.f32.mxu0 0.0
    %837 = vmatmul.mubr.f32.gmra.mxu0 %v744
    %v838 = vpop.f32.mrf.mxu0
    %v839 = vadd.f32 0.0, %v838
    %v840 = vpop.f32.mrf.mxu0
    %841 = vmatprep.mubr.f32.mxu0 0.0
    %842 = vmatmul.mubr.f32.gmra.mxu0 %v745
    %v843 = vpop.f32.mrf.mxu0
    %v844 = vadd.f32 0.0, %v843
    %v845 = vpop.f32.mrf.mxu0
    %846 = vmatprep.mubr.f32.mxu0 0.0
    %847 = vmatmul.mubr.f32.gmra.mxu0 %v746
    %v848 = vpop.f32.mrf.mxu0
    %v849 = vadd.f32 0.0, %v848
    %v850 = vpop.f32.mrf.mxu0
    %851 = vmatprep.mubr.f32.mxu0 0.0
    %852 = vmatmul.mubr.f32.gmra.mxu0 %v747
    %v853 = vpop.f32.mrf.mxu0
    %v854 = vadd.f32 0.0, %v853
    %v855 = vpop.f32.mrf.mxu0
    %856 = vmatprep.mubr.f32.mxu0 0.0
    %857 = vmatmul.mubr.f32.gmra.mxu0 %v748
    %v858 = vpop.f32.mrf.mxu0
    %v859 = vadd.f32 0.0, %v858
    %v860 = vpop.f32.mrf.mxu0
    %861 = vmatprep.mubr.f32.mxu0 0.0
    %862 = vmatmul.mubr.f32.gmra.mxu0 %v749
    %v863 = vpop.f32.mrf.mxu0
    %v864 = vadd.f32 0.0, %v863
    %v865 = vpop.f32.mrf.mxu0
    %866 = vmatprep.mubr.f32.mxu0 0.0
    %867 = vmatmul.mubr.f32.gmra.mxu0 %v750
    %v868 = vpop.f32.mrf.mxu0
    %v869 = vadd.f32 0.0, %v868
    %v870 = vpop.f32.mrf.mxu0
    %871 = vdwg.mxu0
    %v872 = vld [vmem:[%s4] sm:$0xff]
    %v873 = vld [vmem:[%s4 + $0x8] sm:$0xff]
    %v874 = vld [vmem:[%s4 + $0x10] sm:$0xff]
    %v875 = vld [vmem:[%s4 + $0x18] sm:$0xff]
    %v876 = vld [vmem:[%s4 + $0x20] sm:$0xff]
    %v877 = vld [vmem:[%s4 + $0x28] sm:$0xff]
    %v878 = vld [vmem:[%s4 + $0x30] sm:$0xff]
    %v879 = vld [vmem:[%s4 + $0x38] sm:$0xff]
    %v880 = vld [vmem:[%s4 + $0x40] sm:$0xff]
    %v881 = vld [vmem:[%s4 + $0x48] sm:$0xff]
    %v882 = vld [vmem:[%s4 + $0x50] sm:$0xff]
    %v883 = vld [vmem:[%s4 + $0x58] sm:$0xff]
    %v884 = vld [vmem:[%s4 + $0x60] sm:$0xff]
    %v885 = vld [vmem:[%s4 + $0x68] sm:$0xff]
    %v886 = vld [vmem:[%s4 + $0x70] sm:$0xff]
    %v887 = vld [vmem:[%s4 + $0x78] sm:$0xff]
    %v888 = vld [vmem:[%s7 + $0x38] sm:$0xff]
    %v889 = vld [vmem:[%s7 + $0x40] sm:$0xff]
    %v890 = vld [vmem:[%s7 + $0x48] sm:$0xff]
    %v891 = vld [vmem:[%s7 + $0x50] sm:$0xff]
    %v892 = vld [vmem:[%s7 + $0x58] sm:$0xff]
    %v893 = vld [vmem:[%s7 + $0x60] sm:$0xff]
    %v894 = vld [vmem:[%s7 + $0x68] sm:$0xff]
    %v895 = vld [vmem:[%s7 + $0x70] sm:$0xff]
    %v896 = vld [vmem:[%s7 + $0x78] sm:$0xff]
    %v897 = vld [vmem:[%s7 + $0x80] sm:$0xff]
    %v898 = vld [vmem:[%s7 + $0x88] sm:$0xff]
    %v899 = vld [vmem:[%s7 + $0x90] sm:$0xff]
    %v900 = vld [vmem:[%s7 + $0x98] sm:$0xff]
    %v901 = vld [vmem:[%s7 + $0xa0] sm:$0xff]
    %v902 = vld [vmem:[%s7 + $0xa8] sm:$0xff]
    %v903 = vld [vmem:[%s7 + $0xb0] sm:$0xff]
    %905 = vset.pattern.permute.xlu0 0
    %906 = vperm.xlu0 %905, %v888
    %v907 = vpop.permute.xlu0 %906
    %910 = vset.pattern.permute.xlu0 0
    %911 = vperm.xlu0 %910, %v889
    %v912 = vpop.permute.xlu0 %911
    %915 = vset.pattern.permute.xlu0 0
    %916 = vperm.xlu0 %915, %v890
    %v917 = vpop.permute.xlu0 %916
    %920 = vset.pattern.permute.xlu0 0
    %921 = vperm.xlu0 %920, %v891
    %v922 = vpop.permute.xlu0 %921
    %925 = vset.pattern.permute.xlu0 0
    %926 = vperm.xlu0 %925, %v892
    %v927 = vpop.permute.xlu0 %926
    %930 = vset.pattern.permute.xlu0 0
    %931 = vperm.xlu0 %930, %v893
    %v932 = vpop.permute.xlu0 %931
    %935 = vset.pattern.permute.xlu0 0
    %936 = vperm.xlu0 %935, %v894
    %v937 = vpop.permute.xlu0 %936
    %940 = vset.pattern.permute.xlu0 0
    %941 = vperm.xlu0 %940, %v895
    %v942 = vpop.permute.xlu0 %941
    %945 = vset.pattern.permute.xlu0 0
    %946 = vperm.xlu0 %945, %v896
    %v947 = vpop.permute.xlu0 %946
    %950 = vset.pattern.permute.xlu0 0
    %951 = vperm.xlu0 %950, %v897
    %v952 = vpop.permute.xlu0 %951
    %955 = vset.pattern.permute.xlu0 0
    %956 = vperm.xlu0 %955, %v898
    %v957 = vpop.permute.xlu0 %956
    %960 = vset.pattern.permute.xlu0 0
    %961 = vperm.xlu0 %960, %v899
    %v962 = vpop.permute.xlu0 %961
    %965 = vset.pattern.permute.xlu0 0
    %966 = vperm.xlu0 %965, %v900
    %v967 = vpop.permute.xlu0 %966
    %970 = vset.pattern.permute.xlu0 0
    %971 = vperm.xlu0 %970, %v901
    %v972 = vpop.permute.xlu0 %971
    %975 = vset.pattern.permute.xlu0 0
    %976 = vperm.xlu0 %975, %v902
    %v977 = vpop.permute.xlu0 %976
    %980 = vset.pattern.permute.xlu0 0
    %981 = vperm.xlu0 %980, %v903
    %v982 = vpop.permute.xlu0 %981
    %vm984 = vcmask 523264
    %v986 = vsel %vm984, %v872, 0
    %v989 = vsel %vm984, %v873, 0
    %v992 = vsel %vm984, %v874, 0
    %v995 = vsel %vm984, %v875, 0
    %v998 = vsel %vm984, %v876, 0
    %v1001 = vsel %vm984, %v877, 0
    %v1004 = vsel %vm984, %v878, 0
    %v1007 = vsel %vm984, %v879, 0
    %v1010 = vsel %vm984, %v880, 0
    %v1013 = vsel %vm984, %v881, 0
    %v1016 = vsel %vm984, %v882, 0
    %v1019 = vsel %vm984, %v883, 0
    %v1022 = vsel %vm984, %v884, 0
    %v1025 = vsel %vm984, %v885, 0
    %v1028 = vsel %vm984, %v886, 0
    %v1031 = vsel %vm984, %v887, 0
    %1033 = vmatprep.subr.mxu0 0.0
    %1034 = vmatpush1.msra.mxu0 0.0
    %1035 = vmatprep.subr.mxu0 0.0
    %1036 = vmatpush1.msra.mxu0 0.0
    %1037 = vmatprep.subr.mxu0 0.0
    %1038 = vmatpush1.msra.mxu0 0.0
    %1039 = vmatprep.subr.mxu0 0.0
    %1040 = vmatpush1.msra.mxu0 0.0
    %1041 = vmatprep.subr.mxu0 0.0
    %1042 = vmatpush1.msra.mxu0 0.0
    %1043 = vmatprep.subr.mxu0 0.0
    %1044 = vmatpush1.msra.mxu0 0.0
    %1045 = vmatprep.subr.mxu0 0.0
    %1046 = vmatpush1.msra.mxu0 0.0
    %1047 = vmatprep.subr.mxu0 0.0
    %1048 = vmatpush1.msra.mxu0 0.0
    %1049 = vmatprep.subr.mxu0 0.0
    %1050 = vmatpush1.msra.mxu0 %v869
    %1051 = vmatprep.subr.mxu0 0.0
    %1052 = vmatpush1.msra.mxu0 %v864
    %1053 = vmatprep.subr.mxu0 0.0
    %1054 = vmatpush1.msra.mxu0 %v859
    %1055 = vmatprep.subr.mxu0 0.0
    %1056 = vmatpush1.msra.mxu0 %v854
    %1057 = vmatprep.subr.mxu0 0.0
    %1058 = vmatpush1.msra.mxu0 %v849
    %1059 = vmatprep.subr.mxu0 0.0
    %1060 = vmatpush1.msra.mxu0 %v844
    %1061 = vmatprep.subr.mxu0 0.0
    %1062 = vmatpush1.msra.mxu0 %v839
    %1063 = vmatprep.subr.mxu0 0.0
    %1064 = vmatpush1.msra.mxu0 %v834
    %1065 = vmatprep.subr.mxu0 0.0
    %1066 = vmatpush2.msra.mxu0 0.0
    %1067 = vmatprep.subr.mxu0 0.0
    %1068 = vmatpush2.msra.mxu0 0.0
    %1069 = vmatprep.subr.mxu0 0.0
    %1070 = vmatpush2.msra.mxu0 0.0
    %1071 = vmatprep.subr.mxu0 0.0
    %1072 = vmatpush2.msra.mxu0 0.0
    %1073 = vmatprep.subr.mxu0 0.0
    %1074 = vmatpush2.msra.mxu0 0.0
    %1075 = vmatprep.subr.mxu0 0.0
    %1076 = vmatpush2.msra.mxu0 0.0
    %1077 = vmatprep.subr.mxu0 0.0
    %1078 = vmatpush2.msra.mxu0 0.0
    %1079 = vmatprep.subr.mxu0 0.0
    %1080 = vmatpush2.msra.mxu0 0.0
    %1081 = vmatprep.subr.mxu0 0.0
    %1082 = vmatpush2.msra.mxu0 0.0
    %1083 = vmatprep.subr.mxu0 0.0
    %1084 = vmatpush2.msra.mxu0 0.0
    %1085 = vmatprep.subr.mxu0 0.0
    %1086 = vmatpush2.msra.mxu0 0.0
    %1087 = vmatprep.subr.mxu0 0.0
    %1088 = vmatpush2.msra.mxu0 0.0
    %1089 = vmatprep.subr.mxu0 0.0
    %1090 = vmatpush2.msra.mxu0 0.0
    %1091 = vmatprep.subr.mxu0 0.0
    %1092 = vmatpush2.msra.mxu0 0.0
    %1093 = vmatprep.subr.mxu0 0.0
    %1094 = vmatpush2.msra.mxu0 0.0
    %1095 = vmatprep.subr.mxu0 0.0
    %1096 = vmatpush2.msra.mxu0 0.0
    %1097 = vmatprep.mubr.f32.mxu0 0.0
    %1098 = vmatmul.mubr.f32.gmra.mxu0 %v986
    %v1099 = vpop.f32.mrf.mxu0
    %v1100 = vadd.f32 %v907, %v1099
    %v1101 = vpop.f32.mrf.mxu0
    %1102 = vmatprep.mubr.f32.mxu0 0.0
    %1103 = vmatmul.mubr.f32.gmra.mxu0 %v989
    %v1104 = vpop.f32.mrf.mxu0
    %v1105 = vadd.f32 %v912, %v1104
    %v1106 = vpop.f32.mrf.mxu0
    %1107 = vmatprep.mubr.f32.mxu0 0.0
    %1108 = vmatmul.mubr.f32.gmra.mxu0 %v992
    %v1109 = vpop.f32.mrf.mxu0
    %v1110 = vadd.f32 %v917, %v1109
    %v1111 = vpop.f32.mrf.mxu0
    %1112 = vmatprep.mubr.f32.mxu0 0.0
    %1113 = vmatmul.mubr.f32.gmra.mxu0 %v995
    %v1114 = vpop.f32.mrf.mxu0
    %v1115 = vadd.f32 %v922, %v1114
    %v1116 = vpop.f32.mrf.mxu0
    %1117 = vmatprep.mubr.f32.mxu0 0.0
    %1118 = vmatmul.mubr.f32.gmra.mxu0 %v998
    %v1119 = vpop.f32.mrf.mxu0
    %v1120 = vadd.f32 %v927, %v1119
    %v1121 = vpop.f32.mrf.mxu0
    %1122 = vmatprep.mubr.f32.mxu0 0.0
    %1123 = vmatmul.mubr.f32.gmra.mxu0 %v1001
    %v1124 = vpop.f32.mrf.mxu0
    %v1125 = vadd.f32 %v932, %v1124
    %v1126 = vpop.f32.mrf.mxu0
    %1127 = vmatprep.mubr.f32.mxu0 0.0
    %1128 = vmatmul.mubr.f32.gmra.mxu0 %v1004
    %v1129 = vpop.f32.mrf.mxu0
    %v1130 = vadd.f32 %v937, %v1129
    %v1131 = vpop.f32.mrf.mxu0
    %1132 = vmatprep.mubr.f32.mxu0 0.0
    %1133 = vmatmul.mubr.f32.gmra.mxu0 %v1007
    %v1134 = vpop.f32.mrf.mxu0
    %v1135 = vadd.f32 %v942, %v1134
    %v1136 = vpop.f32.mrf.mxu0
    %1137 = vmatprep.mubr.f32.mxu0 0.0
    %1138 = vmatmul.mubr.f32.gmra.mxu0 %v1010
    %v1139 = vpop.f32.mrf.mxu0
    %v1140 = vadd.f32 %v947, %v1139
    %v1141 = vpop.f32.mrf.mxu0
    %1142 = vmatprep.mubr.f32.mxu0 0.0
    %1143 = vmatmul.mubr.f32.gmra.mxu0 %v1013
    %v1144 = vpop.f32.mrf.mxu0
    %v1145 = vadd.f32 %v952, %v1144
    %v1146 = vpop.f32.mrf.mxu0
    %1147 = vmatprep.mubr.f32.mxu0 0.0
    %1148 = vmatmul.mubr.f32.gmra.mxu0 %v1016
    %v1149 = vpop.f32.mrf.mxu0
    %v1150 = vadd.f32 %v957, %v1149
    %v1151 = vpop.f32.mrf.mxu0
    %1152 = vmatprep.mubr.f32.mxu0 0.0
    %1153 = vmatmul.mubr.f32.gmra.mxu0 %v1019
    %v1154 = vpop.f32.mrf.mxu0
    %v1155 = vadd.f32 %v962, %v1154
    %v1156 = vpop.f32.mrf.mxu0
    %1157 = vmatprep.mubr.f32.mxu0 0.0
    %1158 = vmatmul.mubr.f32.gmra.mxu0 %v1022
    %v1159 = vpop.f32.mrf.mxu0
    %v1160 = vadd.f32 %v967, %v1159
    %v1161 = vpop.f32.mrf.mxu0
    %1162 = vmatprep.mubr.f32.mxu0 0.0
    %1163 = vmatmul.mubr.f32.gmra.mxu0 %v1025
    %v1164 = vpop.f32.mrf.mxu0
    %v1165 = vadd.f32 %v972, %v1164
    %v1166 = vpop.f32.mrf.mxu0
    %1167 = vmatprep.mubr.f32.mxu0 0.0
    %1168 = vmatmul.mubr.f32.gmra.mxu0 %v1028
    %v1169 = vpop.f32.mrf.mxu0
    %v1170 = vadd.f32 %v977, %v1169
    %v1171 = vpop.f32.mrf.mxu0
    %1172 = vmatprep.mubr.f32.mxu0 0.0
    %1173 = vmatmul.mubr.f32.gmra.mxu0 %v1031
    %v1174 = vpop.f32.mrf.mxu0
    %v1175 = vadd.f32 %v982, %v1174
    %v1176 = vpop.f32.mrf.mxu0
    %1177 = vdwg.mxu0
    %v1178 = vmax.f32 %v1100, 0.0
    %v1179 = vmax.f32 %v1105, 0.0
    %v1180 = vmax.f32 %v1110, 0.0
    %v1181 = vmax.f32 %v1115, 0.0
    %v1182 = vmax.f32 %v1120, 0.0
    %v1183 = vmax.f32 %v1125, 0.0
    %v1184 = vmax.f32 %v1130, 0.0
    %v1185 = vmax.f32 %v1135, 0.0
    %v1186 = vmax.f32 %v1140, 0.0
    %v1187 = vmax.f32 %v1145, 0.0
    %v1188 = vmax.f32 %v1150, 0.0
    %v1189 = vmax.f32 %v1155, 0.0
    %v1190 = vmax.f32 %v1160, 0.0
    %v1191 = vmax.f32 %v1165, 0.0
    %v1192 = vmax.f32 %v1170, 0.0
    %v1193 = vmax.f32 %v1175, 0.0
    %v1194 = vld [vmem:[%s5] sm:$0xff]
    %v1195 = vld [vmem:[%s5 + $0x8] sm:$0xff]
    %v1196 = vld [vmem:[%s5 + $0x10] sm:$0xff]
    %v1197 = vld [vmem:[%s5 + $0x18] sm:$0xff]
    %v1198 = vld [vmem:[%s5 + $0x20] sm:$0xff]
    %v1199 = vld [vmem:[%s5 + $0x28] sm:$0xff]
    %v1200 = vld [vmem:[%s5 + $0x30] sm:$0xff]
    %v1201 = vld [vmem:[%s5 + $0x38] sm:$0xff]
    %v1202 = vld [vmem:[%s7 + $0xb8] sm:$0xff]
    %v1203 = vld [vmem:[%s7 + $0xc0] sm:$0xff]
    %v1204 = vld [vmem:[%s7 + $0xc8] sm:$0xff]
    %v1205 = vld [vmem:[%s7 + $0xd0] sm:$0xff]
    %v1206 = vld [vmem:[%s7 + $0xd8] sm:$0xff]
    %v1207 = vld [vmem:[%s7 + $0xe0] sm:$0xff]
    %v1208 = vld [vmem:[%s7 + $0xe8] sm:$0xff]
    %v1209 = vld [vmem:[%s7 + $0xf0] sm:$0xff]
    %1211 = vset.pattern.permute.xlu0 0
    %1212 = vperm.xlu0 %1211, %v1202
    %v1213 = vpop.permute.xlu0 %1212
    %1216 = vset.pattern.permute.xlu0 0
    %1217 = vperm.xlu0 %1216, %v1203
    %v1218 = vpop.permute.xlu0 %1217
    %1221 = vset.pattern.permute.xlu0 0
    %1222 = vperm.xlu0 %1221, %v1204
    %v1223 = vpop.permute.xlu0 %1222
    %1226 = vset.pattern.permute.xlu0 0
    %1227 = vperm.xlu0 %1226, %v1205
    %v1228 = vpop.permute.xlu0 %1227
    %1231 = vset.pattern.permute.xlu0 0
    %1232 = vperm.xlu0 %1231, %v1206
    %v1233 = vpop.permute.xlu0 %1232
    %1236 = vset.pattern.permute.xlu0 0
    %1237 = vperm.xlu0 %1236, %v1207
    %v1238 = vpop.permute.xlu0 %1237
    %1241 = vset.pattern.permute.xlu0 0
    %1242 = vperm.xlu0 %1241, %v1208
    %v1243 = vpop.permute.xlu0 %1242
    %1246 = vset.pattern.permute.xlu0 0
    %1247 = vperm.xlu0 %1246, %v1209
    %v1248 = vpop.permute.xlu0 %1247
    %1250 = vmatprep.subr.mxu0 0.0
    %1251 = vmatpush1.msra.mxu0 %v1193
    %1252 = vmatprep.subr.mxu0 0.0
    %1253 = vmatpush1.msra.mxu0 %v1192
    %1254 = vmatprep.subr.mxu0 0.0
    %1255 = vmatpush1.msra.mxu0 %v1191
    %1256 = vmatprep.subr.mxu0 0.0
    %1257 = vmatpush1.msra.mxu0 %v1190
    %1258 = vmatprep.subr.mxu0 0.0
    %1259 = vmatpush1.msra.mxu0 %v1189
    %1260 = vmatprep.subr.mxu0 0.0
    %1261 = vmatpush1.msra.mxu0 %v1188
    %1262 = vmatprep.subr.mxu0 0.0
    %1263 = vmatpush1.msra.mxu0 %v1187
    %1264 = vmatprep.subr.mxu0 0.0
    %1265 = vmatpush1.msra.mxu0 %v1186
    %1266 = vmatprep.subr.mxu0 0.0
    %1267 = vmatpush1.msra.mxu0 %v1185
    %1268 = vmatprep.subr.mxu0 0.0
    %1269 = vmatpush1.msra.mxu0 %v1184
    %1270 = vmatprep.subr.mxu0 0.0
    %1271 = vmatpush1.msra.mxu0 %v1183
    %1272 = vmatprep.subr.mxu0 0.0
    %1273 = vmatpush1.msra.mxu0 %v1182
    %1274 = vmatprep.subr.mxu0 0.0
    %1275 = vmatpush1.msra.mxu0 %v1181
    %1276 = vmatprep.subr.mxu0 0.0
    %1277 = vmatpush1.msra.mxu0 %v1180
    %1278 = vmatprep.subr.mxu0 0.0
    %1279 = vmatpush1.msra.mxu0 %v1179
    %1280 = vmatprep.subr.mxu0 0.0
    %1281 = vmatpush1.msra.mxu0 %v1178
    %1282 = vmatprep.subr.mxu0 0.0
    %1283 = vmatpush2.msra.mxu0 0.0
    %1284 = vmatprep.subr.mxu0 0.0
    %1285 = vmatpush2.msra.mxu0 0.0
    %1286 = vmatprep.subr.mxu0 0.0
    %1287 = vmatpush2.msra.mxu0 0.0
    %1288 = vmatprep.subr.mxu0 0.0
    %1289 = vmatpush2.msra.mxu0 0.0
    %1290 = vmatprep.subr.mxu0 0.0
    %1291 = vmatpush2.msra.mxu0 0.0
    %1292 = vmatprep.subr.mxu0 0.0
    %1293 = vmatpush2.msra.mxu0 0.0
    %1294 = vmatprep.subr.mxu0 0.0
    %1295 = vmatpush2.msra.mxu0 0.0
    %1296 = vmatprep.subr.mxu0 0.0
    %1297 = vmatpush2.msra.mxu0 0.0
    %1298 = vmatprep.subr.mxu0 0.0
    %1299 = vmatpush2.msra.mxu0 0.0
    %1300 = vmatprep.subr.mxu0 0.0
    %1301 = vmatpush2.msra.mxu0 0.0
    %1302 = vmatprep.subr.mxu0 0.0
    %1303 = vmatpush2.msra.mxu0 0.0
    %1304 = vmatprep.subr.mxu0 0.0
    %1305 = vmatpush2.msra.mxu0 0.0
    %1306 = vmatprep.subr.mxu0 0.0
    %1307 = vmatpush2.msra.mxu0 0.0
    %1308 = vmatprep.subr.mxu0 0.0
    %1309 = vmatpush2.msra.mxu0 0.0
    %1310 = vmatprep.subr.mxu0 0.0
    %1311 = vmatpush2.msra.mxu0 0.0
    %1312 = vmatprep.subr.mxu0 0.0
    %1313 = vmatpush2.msra.mxu0 0.0
    %1314 = vmatprep.mubr.f32.mxu0 0.0
    %1315 = vmatmul.mubr.f32.gmra.mxu0 %v1194
    %v1316 = vpop.f32.mrf.mxu0
    %v1317 = vadd.f32 %v1213, %v1316
    %v1318 = vpop.f32.mrf.mxu0
    %1319 = vmatprep.mubr.f32.mxu0 0.0
    %1320 = vmatmul.mubr.f32.gmra.mxu0 %v1195
    %v1321 = vpop.f32.mrf.mxu0
    %v1322 = vadd.f32 %v1218, %v1321
    %v1323 = vpop.f32.mrf.mxu0
    %1324 = vmatprep.mubr.f32.mxu0 0.0
    %1325 = vmatmul.mubr.f32.gmra.mxu0 %v1196
    %v1326 = vpop.f32.mrf.mxu0
    %v1327 = vadd.f32 %v1223, %v1326
    %v1328 = vpop.f32.mrf.mxu0
    %1329 = vmatprep.mubr.f32.mxu0 0.0
    %1330 = vmatmul.mubr.f32.gmra.mxu0 %v1197
    %v1331 = vpop.f32.mrf.mxu0
    %v1332 = vadd.f32 %v1228, %v1331
    %v1333 = vpop.f32.mrf.mxu0
    %1334 = vmatprep.mubr.f32.mxu0 0.0
    %1335 = vmatmul.mubr.f32.gmra.mxu0 %v1198
    %v1336 = vpop.f32.mrf.mxu0
    %v1337 = vadd.f32 %v1233, %v1336
    %v1338 = vpop.f32.mrf.mxu0
    %1339 = vmatprep.mubr.f32.mxu0 0.0
    %1340 = vmatmul.mubr.f32.gmra.mxu0 %v1199
    %v1341 = vpop.f32.mrf.mxu0
    %v1342 = vadd.f32 %v1238, %v1341
    %v1343 = vpop.f32.mrf.mxu0
    %1344 = vmatprep.mubr.f32.mxu0 0.0
    %1345 = vmatmul.mubr.f32.gmra.mxu0 %v1200
    %v1346 = vpop.f32.mrf.mxu0
    %v1347 = vadd.f32 %v1243, %v1346
    %v1348 = vpop.f32.mrf.mxu0
    %1349 = vmatprep.mubr.f32.mxu0 0.0
    %1350 = vmatmul.mubr.f32.gmra.mxu0 %v1201
    %v1351 = vpop.f32.mrf.mxu0
    %v1352 = vadd.f32 %v1248, %v1351
    %v1353 = vpop.f32.mrf.mxu0
    %1354 = vdwg.mxu0
    %v1355 = vxor.u32 %v1317, 2147483648
    %v1356 = vxor.u32 %v1322, 2147483648
    %v1357 = vxor.u32 %v1327, 2147483648
    %v1358 = vxor.u32 %v1332, 2147483648
    %v1359 = vxor.u32 %v1337, 2147483648
    %v1360 = vxor.u32 %v1342, 2147483648
    %v1361 = vxor.u32 %v1347, 2147483648
    %v1362 = vxor.u32 %v1352, 2147483648
    %v1363 = vmul.f32 %v1355, 1.442695
    %v1364 = vpow.pop %v1363
    %v1365 = vmul.f32 %v1356, 1.442695
    %v1366 = vpow.pop %v1365
    %v1367 = vmul.f32 %v1357, 1.442695
    %v1368 = vpow.pop %v1367
    %v1369 = vmul.f32 %v1358, 1.442695
    %v1370 = vpow.pop %v1369
    %v1371 = vmul.f32 %v1359, 1.442695
    %v1372 = vpow.pop %v1371
    %v1373 = vmul.f32 %v1360, 1.442695
    %v1374 = vpow.pop %v1373
    %v1375 = vmul.f32 %v1361, 1.442695
    %v1376 = vpow.pop %v1375
    %v1377 = vmul.f32 %v1362, 1.442695
    %v1378 = vpow.pop %v1377
    %v1379 = vadd.f32 %v1364, 1.0
    %v1380 = vadd.f32 %v1366, 1.0
    %v1381 = vadd.f32 %v1368, 1.0
    %v1382 = vadd.f32 %v1370, 1.0
    %v1383 = vadd.f32 %v1372, 1.0
    %v1384 = vadd.f32 %v1374, 1.0
    %v1385 = vadd.f32 %v1376, 1.0
    %v1386 = vadd.f32 %v1378, 1.0
    %v1387 = vrcp.pop %v1379
    %v1388 = vmul.f32 1.0, %v1387
    %v1389 = vrcp.pop %v1380
    %v1390 = vmul.f32 1.0, %v1389
    %v1391 = vrcp.pop %v1381
    %v1392 = vmul.f32 1.0, %v1391
    %v1393 = vrcp.pop %v1382
    %v1394 = vmul.f32 1.0, %v1393
    %v1395 = vrcp.pop %v1383
    %v1396 = vmul.f32 1.0, %v1395
    %v1397 = vrcp.pop %v1384
    %v1398 = vmul.f32 1.0, %v1397
    %v1399 = vrcp.pop %v1385
    %v1400 = vmul.f32 1.0, %v1399
    %v1401 = vrcp.pop %v1386
    %v1402 = vmul.f32 1.0, %v1401
    %v1403 = vld [vmem:[%s8] sm:$0x3]
    %vm1404 = vcmask 15360
    %v1406 = vsel %vm1404, %v1388, 0
    %v1409 = vsel %vm1404, %v1390, 0
    %v1412 = vsel %vm1404, %v1392, 0
    %v1415 = vsel %vm1404, %v1394, 0
    %v1418 = vsel %vm1404, %v1396, 0
    %v1421 = vsel %vm1404, %v1398, 0
    %v1424 = vsel %vm1404, %v1400, 0
    %v1427 = vsel %vm1404, %v1402, 0
    %vm1429 = vcmask 1041408
    %v1431 = vsel %vm1429, %v1403, 0
    %1433 = vmatprep.subr.mxu0 0.0
    %1434 = vmatpush1.msra.mxu0 0.0
    %1435 = vmatprep.subr.mxu0 0.0
    %1436 = vmatpush1.msra.mxu0 0.0
    %1437 = vmatprep.subr.mxu0 0.0
    %1438 = vmatpush1.msra.mxu0 0.0
    %1439 = vmatprep.subr.mxu0 0.0
    %1440 = vmatpush1.msra.mxu0 0.0
    %1441 = vmatprep.subr.mxu0 0.0
    %1442 = vmatpush1.msra.mxu0 0.0
    %1443 = vmatprep.subr.mxu0 0.0
    %1444 = vmatpush1.msra.mxu0 0.0
    %1445 = vmatprep.subr.mxu0 0.0
    %1446 = vmatpush1.msra.mxu0 0.0
    %1447 = vmatprep.subr.mxu0 0.0
    %1448 = vmatpush1.msra.mxu0 0.0
    %1449 = vmatprep.subr.mxu0 0.0
    %1450 = vmatpush1.msra.mxu0 0.0
    %1451 = vmatprep.subr.mxu0 0.0
    %1452 = vmatpush1.msra.mxu0 0.0
    %1453 = vmatprep.subr.mxu0 0.0
    %1454 = vmatpush1.msra.mxu0 0.0
    %1455 = vmatprep.subr.mxu0 0.0
    %1456 = vmatpush1.msra.mxu0 0.0
    %1457 = vmatprep.subr.mxu0 0.0
    %1458 = vmatpush1.msra.mxu0 0.0
    %1459 = vmatprep.subr.mxu0 0.0
    %1460 = vmatpush1.msra.mxu0 0.0
    %1461 = vmatprep.subr.mxu0 0.0
    %1462 = vmatpush1.msra.mxu0 0.0
    %1463 = vmatprep.subr.mxu0 0.0
    %1464 = vmatpush1.msra.mxu0 %v1431
    %1465 = vmatprep.subr.mxu0 0.0
    %1466 = vmatpush2.msra.mxu0 0.0
    %1467 = vmatprep.subr.mxu0 0.0
    %1468 = vmatpush2.msra.mxu0 0.0
    %1469 = vmatprep.subr.mxu0 0.0
    %1470 = vmatpush2.msra.mxu0 0.0
    %1471 = vmatprep.subr.mxu0 0.0
    %1472 = vmatpush2.msra.mxu0 0.0
    %1473 = vmatprep.subr.mxu0 0.0
    %1474 = vmatpush2.msra.mxu0 0.0
    %1475 = vmatprep.subr.mxu0 0.0
    %1476 = vmatpush2.msra.mxu0 0.0
    %1477 = vmatprep.subr.mxu0 0.0
    %1478 = vmatpush2.msra.mxu0 0.0
    %1479 = vmatprep.subr.mxu0 0.0
    %1480 = vmatpush2.msra.mxu0 0.0
    %1481 = vmatprep.subr.mxu0 0.0
    %1482 = vmatpush2.msra.mxu0 0.0
    %1483 = vmatprep.subr.mxu0 0.0
    %1484 = vmatpush2.msra.mxu0 0.0
    %1485 = vmatprep.subr.mxu0 0.0
    %1486 = vmatpush2.msra.mxu0 0.0
    %1487 = vmatprep.subr.mxu0 0.0
    %1488 = vmatpush2.msra.mxu0 0.0
    %1489 = vmatprep.subr.mxu0 0.0
    %1490 = vmatpush2.msra.mxu0 0.0
    %1491 = vmatprep.subr.mxu0 0.0
    %1492 = vmatpush2.msra.mxu0 0.0
    %1493 = vmatprep.subr.mxu0 0.0
    %1494 = vmatpush2.msra.mxu0 0.0
    %1495 = vmatprep.subr.mxu0 0.0
    %1496 = vmatpush2.msra.mxu0 0.0
    %1497 = vmatprep.mubr.f32.mxu0 0.0
    %1498 = vmatmul.mubr.f32.gmra.mxu0 %v1406
    %v1499 = vpop.f32.mrf.mxu0
    %v1500 = vadd.f32 0.0, %v1499
    %v1501 = vpop.f32.mrf.mxu0
    %1502 = vmatprep.mubr.f32.mxu0 0.0
    %1503 = vmatmul.mubr.f32.gmra.mxu0 %v1409
    %v1504 = vpop.f32.mrf.mxu0
    %v1505 = vadd.f32 0.0, %v1504
    %v1506 = vpop.f32.mrf.mxu0
    %1507 = vmatprep.mubr.f32.mxu0 0.0
    %1508 = vmatmul.mubr.f32.gmra.mxu0 %v1412
    %v1509 = vpop.f32.mrf.mxu0
    %v1510 = vadd.f32 0.0, %v1509
    %v1511 = vpop.f32.mrf.mxu0
    %1512 = vmatprep.mubr.f32.mxu0 0.0
    %1513 = vmatmul.mubr.f32.gmra.mxu0 %v1415
    %v1514 = vpop.f32.mrf.mxu0
    %v1515 = vadd.f32 0.0, %v1514
    %v1516 = vpop.f32.mrf.mxu0
    %1517 = vmatprep.mubr.f32.mxu0 0.0
    %1518 = vmatmul.mubr.f32.gmra.mxu0 %v1418
    %v1519 = vpop.f32.mrf.mxu0
    %v1520 = vadd.f32 0.0, %v1519
    %v1521 = vpop.f32.mrf.mxu0
    %1522 = vmatprep.mubr.f32.mxu0 0.0
    %1523 = vmatmul.mubr.f32.gmra.mxu0 %v1421
    %v1524 = vpop.f32.mrf.mxu0
    %v1525 = vadd.f32 0.0, %v1524
    %v1526 = vpop.f32.mrf.mxu0
    %1527 = vmatprep.mubr.f32.mxu0 0.0
    %1528 = vmatmul.mubr.f32.gmra.mxu0 %v1424
    %v1529 = vpop.f32.mrf.mxu0
    %v1530 = vadd.f32 0.0, %v1529
    %v1531 = vpop.f32.mrf.mxu0
    %1532 = vmatprep.mubr.f32.mxu0 0.0
    %1533 = vmatmul.mubr.f32.gmra.mxu0 %v1427
    %v1534 = vpop.f32.mrf.mxu0
    %v1535 = vadd.f32 0.0, %v1534
    %v1536 = vpop.f32.mrf.mxu0
    %1537 = vdwg.mxu0
    %v1538 = vmul.f32 %v743, %v1500
    %v1539 = vmul.f32 %v744, %v1505
    %v1540 = vmul.f32 %v745, %v1510
    %v1541 = vmul.f32 %v746, %v1515
    %v1542 = vmul.f32 %v747, %v1520
    %v1543 = vmul.f32 %v748, %v1525
    %v1544 = vmul.f32 %v749, %v1530
    %v1545 = vmul.f32 %v750, %v1535
    %v1546 = vld [vmem:[%s6] sm:$0xff]
    %v1547 = vld [vmem:[%s6 + $0x8] sm:$0xff]
    %v1548 = vld [vmem:[%s6 + $0x10] sm:$0xff]
    %v1549 = vld [vmem:[%s6 + $0x18] sm:$0xff]
    %v1550 = vld [vmem:[%s6 + $0x20] sm:$0xff]
    %v1551 = vld [vmem:[%s6 + $0x28] sm:$0xff]
    %v1552 = vld [vmem:[%s6 + $0x30] sm:$0xff]
    %v1553 = vld [vmem:[%s6 + $0x38] sm:$0xff]
    %v1554 = vld [vmem:[%s7 + $0xf8] sm:$0xff]
    %v1555 = vld [vmem:[%s7 + $0x100] sm:$0xff]
    %v1556 = vld [vmem:[%s7 + $0x108] sm:$0xff]
    %v1557 = vld [vmem:[%s7 + $0x110] sm:$0xff]
    %v1558 = vld [vmem:[%s7 + $0x118] sm:$0xff]
    %v1559 = vld [vmem:[%s7 + $0x120] sm:$0xff]
    %v1560 = vld [vmem:[%s7 + $0x128] sm:$0xff]
    %v1561 = vld [vmem:[%s7 + $0x130] sm:$0xff]
    %1563 = vset.pattern.permute.xlu0 0
    %1564 = vperm.xlu0 %1563, %v1554
    %v1565 = vpop.permute.xlu0 %1564
    %1568 = vset.pattern.permute.xlu0 0
    %1569 = vperm.xlu0 %1568, %v1555
    %v1570 = vpop.permute.xlu0 %1569
    %1573 = vset.pattern.permute.xlu0 0
    %1574 = vperm.xlu0 %1573, %v1556
    %v1575 = vpop.permute.xlu0 %1574
    %1578 = vset.pattern.permute.xlu0 0
    %1579 = vperm.xlu0 %1578, %v1557
    %v1580 = vpop.permute.xlu0 %1579
    %1583 = vset.pattern.permute.xlu0 0
    %1584 = vperm.xlu0 %1583, %v1558
    %v1585 = vpop.permute.xlu0 %1584
    %1588 = vset.pattern.permute.xlu0 0
    %1589 = vperm.xlu0 %1588, %v1559
    %v1590 = vpop.permute.xlu0 %1589
    %1593 = vset.pattern.permute.xlu0 0
    %1594 = vperm.xlu0 %1593, %v1560
    %v1595 = vpop.permute.xlu0 %1594
    %1598 = vset.pattern.permute.xlu0 0
    %1599 = vperm.xlu0 %1598, %v1561
    %v1600 = vpop.permute.xlu0 %1599
    %v1603 = vsel %vm984, %v1546, 0
    %v1606 = vsel %vm984, %v1547, 0
    %v1609 = vsel %vm984, %v1548, 0
    %v1612 = vsel %vm984, %v1549, 0
    %v1615 = vsel %vm984, %v1550, 0
    %v1618 = vsel %vm984, %v1551, 0
    %v1621 = vsel %vm984, %v1552, 0
    %v1624 = vsel %vm984, %v1553, 0
    %1626 = vmatprep.subr.mxu0 0.0
    %1627 = vmatpush1.msra.mxu0 0.0
    %1628 = vmatprep.subr.mxu0 0.0
    %1629 = vmatpush1.msra.mxu0 0.0
    %1630 = vmatprep.subr.mxu0 0.0
    %1631 = vmatpush1.msra.mxu0 0.0
    %1632 = vmatprep.subr.mxu0 0.0
    %1633 = vmatpush1.msra.mxu0 0.0
    %1634 = vmatprep.subr.mxu0 0.0
    %1635 = vmatpush1.msra.mxu0 0.0
    %1636 = vmatprep.subr.mxu0 0.0
    %1637 = vmatpush1.msra.mxu0 0.0
    %1638 = vmatprep.subr.mxu0 0.0
    %1639 = vmatpush1.msra.mxu0 0.0
    %1640 = vmatprep.subr.mxu0 0.0
    %1641 = vmatpush1.msra.mxu0 0.0
    %1642 = vmatprep.subr.mxu0 0.0
    %1643 = vmatpush1.msra.mxu0 %v1545
    %1644 = vmatprep.subr.mxu0 0.0
    %1645 = vmatpush1.msra.mxu0 %v1544
    %1646 = vmatprep.subr.mxu0 0.0
    %1647 = vmatpush1.msra.mxu0 %v1543
    %1648 = vmatprep.subr.mxu0 0.0
    %1649 = vmatpush1.msra.mxu0 %v1542
    %1650 = vmatprep.subr.mxu0 0.0
    %1651 = vmatpush1.msra.mxu0 %v1541
    %1652 = vmatprep.subr.mxu0 0.0
    %1653 = vmatpush1.msra.mxu0 %v1540
    %1654 = vmatprep.subr.mxu0 0.0
    %1655 = vmatpush1.msra.mxu0 %v1539
    %1656 = vmatprep.subr.mxu0 0.0
    %1657 = vmatpush1.msra.mxu0 %v1538
    %1658 = vmatprep.subr.mxu0 0.0
    %1659 = vmatpush2.msra.mxu0 0.0
    %1660 = vmatprep.subr.mxu0 0.0
    %1661 = vmatpush2.msra.mxu0 0.0
    %1662 = vmatprep.subr.mxu0 0.0
    %1663 = vmatpush2.msra.mxu0 0.0
    %1664 = vmatprep.subr.mxu0 0.0
    %1665 = vmatpush2.msra.mxu0 0.0
    %1666 = vmatprep.subr.mxu0 0.0
    %1667 = vmatpush2.msra.mxu0 0.0
    %1668 = vmatprep.subr.mxu0 0.0
    %1669 = vmatpush2.msra.mxu0 0.0
    %1670 = vmatprep.subr.mxu0 0.0
    %1671 = vmatpush2.msra.mxu0 0.0
    %1672 = vmatprep.subr.mxu0 0.0
    %1673 = vmatpush2.msra.mxu0 0.0
    %1674 = vmatprep.subr.mxu0 0.0
    %1675 = vmatpush2.msra.mxu0 0.0
    %1676 = vmatprep.subr.mxu0 0.0
    %1677 = vmatpush2.msra.mxu0 0.0
    %1678 = vmatprep.subr.mxu0 0.0
    %1679 = vmatpush2.msra.mxu0 0.0
    %1680 = vmatprep.subr.mxu0 0.0
    %1681 = vmatpush2.msra.mxu0 0.0
    %1682 = vmatprep.subr.mxu0 0.0
    %1683 = vmatpush2.msra.mxu0 0.0
    %1684 = vmatprep.subr.mxu0 0.0
    %1685 = vmatpush2.msra.mxu0 0.0
    %1686 = vmatprep.subr.mxu0 0.0
    %1687 = vmatpush2.msra.mxu0 0.0
    %1688 = vmatprep.subr.mxu0 0.0
    %1689 = vmatpush2.msra.mxu0 0.0
    %1690 = vmatprep.mubr.f32.mxu0 0.0
    %1691 = vmatmul.mubr.f32.gmra.mxu0 %v1603
    %v1692 = vpop.f32.mrf.mxu0
    %v1693 = vadd.f32 %v1565, %v1692
    %v1694 = vpop.f32.mrf.mxu0
    %1695 = vmatprep.mubr.f32.mxu0 0.0
    %1696 = vmatmul.mubr.f32.gmra.mxu0 %v1606
    %v1697 = vpop.f32.mrf.mxu0
    %v1698 = vadd.f32 %v1570, %v1697
    %v1699 = vpop.f32.mrf.mxu0
    %1700 = vmatprep.mubr.f32.mxu0 0.0
    %1701 = vmatmul.mubr.f32.gmra.mxu0 %v1609
    %v1702 = vpop.f32.mrf.mxu0
    %v1703 = vadd.f32 %v1575, %v1702
    %v1704 = vpop.f32.mrf.mxu0
    %1705 = vmatprep.mubr.f32.mxu0 0.0
    %1706 = vmatmul.mubr.f32.gmra.mxu0 %v1612
    %v1707 = vpop.f32.mrf.mxu0
    %v1708 = vadd.f32 %v1580, %v1707
    %v1709 = vpop.f32.mrf.mxu0
    %1710 = vmatprep.mubr.f32.mxu0 0.0
    %1711 = vmatmul.mubr.f32.gmra.mxu0 %v1615
    %v1712 = vpop.f32.mrf.mxu0
    %v1713 = vadd.f32 %v1585, %v1712
    %v1714 = vpop.f32.mrf.mxu0
    %1715 = vmatprep.mubr.f32.mxu0 0.0
    %1716 = vmatmul.mubr.f32.gmra.mxu0 %v1618
    %v1717 = vpop.f32.mrf.mxu0
    %v1718 = vadd.f32 %v1590, %v1717
    %v1719 = vpop.f32.mrf.mxu0
    %1720 = vmatprep.mubr.f32.mxu0 0.0
    %1721 = vmatmul.mubr.f32.gmra.mxu0 %v1621
    %v1722 = vpop.f32.mrf.mxu0
    %v1723 = vadd.f32 %v1595, %v1722
    %v1724 = vpop.f32.mrf.mxu0
    %1725 = vmatprep.mubr.f32.mxu0 0.0
    %1726 = vmatmul.mubr.f32.gmra.mxu0 %v1624
    %v1727 = vpop.f32.mrf.mxu0
    %v1728 = vadd.f32 %v1600, %v1727
    %v1729 = vpop.f32.mrf.mxu0
    %1730 = vdwg.mxu0
    %v1731 = vmax.f32 %v1693, 0.0
    %v1732 = vmax.f32 %v1698, 0.0
    %v1733 = vmax.f32 %v1703, 0.0
    %v1734 = vmax.f32 %v1708, 0.0
    %v1735 = vmax.f32 %v1713, 0.0
    %v1736 = vmax.f32 %v1718, 0.0
    %v1737 = vmax.f32 %v1723, 0.0
    %v1738 = vmax.f32 %v1728, 0.0
    %1739 = vst [vmem:[#allocation3] sm:$0xff] %v1731
    %1740 = vst [vmem:[#allocation3 + $0x8] sm:$0xff] %v1732
    %1741 = vst [vmem:[#allocation3 + $0x10] sm:$0xff] %v1733
    %1742 = vst [vmem:[#allocation3 + $0x18] sm:$0xff] %v1734
    %1743 = vst [vmem:[#allocation3 + $0x20] sm:$0xff] %v1735
    %1744 = vst [vmem:[#allocation3 + $0x28] sm:$0xff] %v1736
    %1745 = vst [vmem:[#allocation3 + $0x30] sm:$0xff] %v1737
    %1746 = vst [vmem:[#allocation3 + $0x38] sm:$0xff] %v1738
    // Predicated region
    $region46: #{tpu_custom_call.1} parent=1 // pred_check
      _
    $region47: #{tpu_custom_call.1} parent=1 // pred_check_branch
      %1748 = sbr.rel (0) target = $region49
    $region48: #{tpu_custom_call.1} parent=1 // pred_region
      %s1750 = ssub.s32 1024, 1024
      %1751 = vsyncadd [#allocation4], %s1750
      %s1752 = sshll.u32 [#allocation3], 4
      %s1753 = int_to_ptr.vmem [resolvable:$true] %s1752
      %1758 = dma.vmem_to_hbm [thread:$0]  %s1753, 1024, %s11, [#allocation4], 128, 128, 8
    $region49: #{tpu_custom_call.1} parent=1 // pred_fallthru
      _
    // Predicated region
    $region50: #{tpu_custom_call.1} parent=1 // pred_check
      _
    $region51: #{tpu_custom_call.1} parent=1 // pred_check_branch
      %1760 = sbr.rel (0) target = $region53
    $region52: #{tpu_custom_call.1} parent=1 // pred_region
      %1761 = dma.done [#allocation4], 1024
    $region53: #{tpu_custom_call.1} parent=1 // pred_fallthru
      _
    %1762 = vsyncpa [#allocation4], 1

</llo_original>
